<compile_context>
chip_gen: v7x
topology: tpu7x:2x2x1
jax: 0.10.0
libtpu: 0.0.40
codegen_flags: <defaults>
</compile_context>

<pallas_src>
from functools import partial

import jax
import jax.numpy as jnp
from jax import lax
from jax.experimental import pallas as pl
from jax.experimental.pallas import tpu as pltpu


def _matT(a, b):
    """(M, K) x (N, K) -> (M, N), contracting the shared last axis (== a @ b.T, torch Linear)."""
    return lax.dot_general(a, b, (((1,), (1,)), ((), ())),
                           preferred_element_type=jnp.float32)


# --------------------------------------------------------------------------
# Single fused kernel: stacked Linear + iterated diffusion + BN + ReLU + fc1 + fc2
# --------------------------------------------------------------------------
def dcnn_fused_kernel(x_ref, lblk_ref, wall_ref, b0_ref, g_ref, be_ref,
                      w1_ref, b1_ref, w2_ref, b2_ref, o_ref):
    # x_ref   : (batch*m, w)        bf16  node features, rows ordered (batch, node)
    # lblk_ref: (batch*m, batch*m)  bf16  block-diagonal diffusion operator I_batch (x) L
    # wall_ref: (H*hid, w)          bf16  stacked per-hop Linear weights (torch (out,in))
    # b0_ref  : (1, H*hid)          f32   hop-0 Linear bias, live in lanes [0, hid)
    # g_ref   : (H, H*hid)          f32   BN gamma, row h live in lanes [h*hid,(h+1)*hid)
    # be_ref  : (H, H*hid)          f32   BN beta, same layout
    # w1_ref  : (256, m*H*hid)      bf16  fc1 weight (torch layout)
    # b1_ref  : (1, 256)            f32
    # w2_ref  : (ncls_pad, 256)     bf16  fc2 weight, zero-padded to a 128-lane multiple
    # b2_ref  : (1, ncls_pad)       f32
    # o_ref   : (batch, ncls_pad)   f32
    bm = x_ref.shape[0]
    H, HH = g_ref.shape
    hid = HH // H
    F = w1_ref.shape[1]
    m = F // HH
    batch = bm // m

    lane = lax.broadcasted_iota(jnp.int32, (1, HH), 1)

    # Stacked per-hop Linear: one MXU call; y[:, h*hid:(h+1)*hid] = x @ W_h^T.
    y = _matT(x_ref[...], wall_ref[...])                     # (batch*m, H*hid) f32

    # Hop 0: Linear + bias + ReLU (torch applies no BatchNorm to hop 0).
    s = jnp.where(lane < hid, jnp.maximum(y + b0_ref[...], 0.0), 0.0)

    # Hops 1..H-1: iterate t <- (I (x) L) @ t; after h steps, slice h carries
    # L^h @ (x W_h^T).  BatchNorm uses per-call batch statistics (training mode);
    # the hop-h Linear bias cancels exactly inside the (z - mean) normalization and
    # is therefore skipped.  Stats are computed full-width (lanes are independent,
    # same reduction cost) and only slice h is selected into s.
    t = y
    for h in range(1, H):
        t = jnp.dot(lblk_ref[...], t.astype(jnp.bfloat16),
                    preferred_element_type=jnp.float32)      # (batch*m, H*hid) f32
        mean = jnp.mean(t, axis=0, keepdims=True)
        var = jnp.mean(t * t, axis=0, keepdims=True) - mean * mean   # single-pass stats
        z = (t - mean) * lax.rsqrt(var + 1e-5) * g_ref[h:h + 1, :] + be_ref[h:h + 1, :]
        mask = (lane >= h * hid) & (lane < (h + 1) * hid)
        s = jnp.where(mask, jnp.maximum(z, 0.0), s)

    # The one unavoidable relayout (12 KB): (batch*m, H*hid) -> (batch, m*H*hid),
    # node-major then (hop, channel) — exactly torch's s.view(batch, m*hid*H).
    s3 = s.reshape(batch, m, HH)
    s_flat = jnp.concatenate([s3[:, n, :] for n in range(m)], axis=1)  # (batch, m*HH)

    # TODO(synk): nn.Dropout is stochastic; applied here as identity (inference mode).
    h1 = jnp.maximum(_matT(s_flat.astype(jnp.bfloat16), w1_ref[...]) + b1_ref[...], 0.0)
    o_ref[...] = _matT(h1.astype(jnp.bfloat16), w2_ref[...]) + b2_ref[...]


# --------------------------------------------------------------------------
# Jitted wrapper: weight prep (bf16 casts, stacking, kron, lane padding) + one pallas_call.
# --------------------------------------------------------------------------
@partial(jax.jit, static_argnames=("num_layers",))
def dcnn_forward(x_nwm, L, Ws, bs, gamma, beta, W1, b1, W2, b2, *, num_layers):
    batch, w, m = x_nwm.shape
    H = num_layers + 1
    hid = Ws.shape[1]
    HH = H * hid
    n_hidden, F = W1.shape
    n_cls = W2.shape[0]
    assert F == m * HH
    ncls_pad = ((n_cls + 127) // 128) * 128

    # ---- MXU operands in bf16 (f32 accumulation inside the kernel) ----
    x2 = jnp.transpose(x_nwm, (0, 2, 1)).reshape(batch * m, w).astype(jnp.bfloat16)
    l_blk = jnp.kron(jnp.eye(batch, dtype=jnp.float32),
                     L.astype(jnp.float32)).astype(jnp.bfloat16)     # (batch*m, batch*m)
    w_all = Ws.reshape(HH, w).astype(jnp.bfloat16)                   # stacked hop weights
    w1 = W1.astype(jnp.bfloat16)
    w2p = jnp.zeros((ncls_pad, n_hidden), jnp.float32).at[:n_cls].set(W2)
    w2p = w2p.astype(jnp.bfloat16)                                   # lane-padded fc2

    # ---- full-lane-width per-hop VPU params (f32); only slice h of row h is used ----
    b0_row = jnp.zeros((1, HH), jnp.float32).at[0, :hid].set(bs[0])
    eye_h = jnp.eye(H, dtype=jnp.float32)
    g_rows = (eye_h[:, :, None] * gamma.astype(jnp.float32)[:, None, :]).reshape(H, HH)
    be_rows = (eye_h[:, :, None] * beta.astype(jnp.float32)[:, None, :]).reshape(H, HH)
    b1r = b1.reshape(1, n_hidden).astype(jnp.float32)
    b2p = jnp.zeros((1, ncls_pad), jnp.float32).at[0, :n_cls].set(b2)

    vmem = pl.BlockSpec(memory_space=pltpu.MemorySpace.VMEM)
    out = pl.pallas_call(
        dcnn_fused_kernel,
        out_shape=jax.ShapeDtypeStruct((batch, ncls_pad), jnp.float32),
        in_specs=[vmem] * 10,
        out_specs=vmem,
    )(x2, l_blk, w_all, b0_row, g_rows, be_rows, w1, b1r, w2p, b2p)
    return out[:, :n_cls]


# --------------------------------------------------------------------------
# Pure-JAX f32 reference mirroring the torch forward (for correctness check)
# --------------------------------------------------------------------------
def reference_forward(x_nwm, L, Ws, bs, gamma, beta, W1, b1, W2, b2, num_layers):
    batch, w, m = x_nwm.shape
    hid = Ws.shape[1]
    H = num_layers + 1
    x = jnp.transpose(x_nwm, (0, 2, 1))                # (batch, m, w)
    t = x.reshape(batch * m, w)
    s = [jnp.maximum(t @ Ws[0].T + bs[0], 0.0)]
    P = L
    for i in range(1, H):
        t = jnp.einsum('ij,bjw->biw', P, x).reshape(batch * m, w)
        t = t @ Ws[i].T + bs[i]                        # (batch*m, hid)
        mean = t.mean(axis=0, keepdims=True)
        var = ((t - mean) ** 2).mean(axis=0, keepdims=True)
        t = (t - mean) / jnp.sqrt(var + 1e-5) * gamma[i] + beta[i]
        s.append(jnp.maximum(t, 0.0))
        P = L @ P
    s_cat = jnp.concatenate(s, axis=1).reshape(batch, m * hid * H)
    h = jnp.maximum(s_cat @ W1.T + b1, 0.0)
    return h @ W2.T + b2


if __name__ == "__main__":
    batch, m, w, hid, num_layers, n_cls = 2, 16, 64, 32, 2, 20
    H = num_layers + 1
    F = hid * H * m

    key = jax.random.PRNGKey(0)
    ks = jax.random.split(key, 8)
    x_nwm = jax.random.normal(ks[0], (batch, w, m), jnp.float32)   # torch input layout
    L = jax.random.normal(ks[1], (m, m), jnp.float32) / jnp.sqrt(m)

    # Parameters (synthetic init; torch Linear weight shape = (out, in))
    Ws = 0.1 * jax.random.normal(ks[2], (H, hid, w), jnp.float32)
    bs = 0.1 * jax.random.normal(ks[3], (H, hid), jnp.float32)
    gamma = jnp.ones((H, hid), jnp.float32)    # BatchNorm1d weight init
    beta = jnp.zeros((H, hid), jnp.float32)    # BatchNorm1d bias init
    W1 = 0.05 * jax.random.normal(ks[4], (256, F), jnp.float32)
    b1 = 0.05 * jax.random.normal(ks[5], (256,), jnp.float32)
    W2 = 0.05 * jax.random.normal(ks[6], (n_cls, 256), jnp.float32)
    b2 = 0.05 * jax.random.normal(ks[7], (n_cls,), jnp.float32)

    out = dcnn_forward(x_nwm, L, Ws, bs, gamma, beta, W1, b1, W2, b2,
                       num_layers=num_layers)
    out = jax.block_until_ready(out)
    assert out.shape == (batch, n_cls)

    ref = reference_forward(x_nwm, L, Ws, bs, gamma, beta, W1, b1, W2, b2, num_layers)
    ref = jax.block_until_ready(ref)
    # bf16 MXU operands (f32 accumulation) -> compare against the f32 reference at
    # bf16-appropriate tolerance.
    err = jnp.max(jnp.abs(out - ref))
    assert jnp.allclose(out, ref, atol=5e-2, rtol=5e-2), f"max abs err {err}"

    print("KERNEL_OK")
</pallas_src>

<mosaic_0001>
module attributes {stable_mosaic.version = 11 : i64} {
  func.func @dcnn_fused_kernel(%arg0: memref<32x64xbf16, #tpu.memory_space<vmem>>, %arg1: memref<32x32xbf16, #tpu.memory_space<vmem>>, %arg2: memref<96x64xbf16, #tpu.memory_space<vmem>>, %arg3: memref<1x96xf32, #tpu.memory_space<vmem>>, %arg4: memref<3x96xf32, #tpu.memory_space<vmem>>, %arg5: memref<3x96xf32, #tpu.memory_space<vmem>>, %arg6: memref<256x1536xbf16, #tpu.memory_space<vmem>>, %arg7: memref<1x256xf32, #tpu.memory_space<vmem>>, %arg8: memref<128x256xbf16, #tpu.memory_space<vmem>>, %arg9: memref<1x128xf32, #tpu.memory_space<vmem>>, %arg10: memref<2x128xf32, #tpu.memory_space<vmem>>) attributes {dimension_semantics = [], scalar_prefetch = 0 : i64, scratch_operands = 0 : i64, tpu.core_type = #tpu.core_type<tc>} {
    %0 = tpu.iota {dimensions = array<i32: 1>} : vector<1x96xi32>
    %c0 = arith.constant 0 : index
    %c0_0 = arith.constant 0 : index
    %1 = vector.load %arg0[%c0, %c0_0] : memref<32x64xbf16, #tpu.memory_space<vmem>>, vector<32x64xbf16>
    %c0_1 = arith.constant 0 : index
    %c0_2 = arith.constant 0 : index
    %2 = vector.load %arg2[%c0_1, %c0_2] : memref<96x64xbf16, #tpu.memory_space<vmem>>, vector<96x64xbf16>
    %cst = arith.constant dense<0.000000e+00> : vector<32x96xf32>
    %3 = tpu.matmul %1, %2, %cst {dimension_numbers = #tpu.dot_dimension_numbers<[1], [1], [0], [0], [0, 0, 1, 0], [], []>} : vector<32x64xbf16>, vector<96x64xbf16>, vector<32x96xf32> -> vector<32x96xf32>
    %c32_i32 = arith.constant 32 : i32
    %4 = vector.broadcast %c32_i32 : i32 to vector<1x96xi32>
    %5 = arith.cmpi slt, %0, %4 : vector<1x96xi32>
    %c0_3 = arith.constant 0 : index
    %c0_4 = arith.constant 0 : index
    %6 = vector.load %arg3[%c0_3, %c0_4] : memref<1x96xf32, #tpu.memory_space<vmem>>, vector<1x96xf32>
    %7 = vector.broadcast %6 : vector<1x96xf32> to vector<32x96xf32>
    %8 = arith.addf %3, %7 : vector<32x96xf32>
    %cst_5 = arith.constant 0.000000e+00 : f32
    %9 = vector.broadcast %cst_5 : f32 to vector<32x96xf32>
    %10 = arith.maximumf %8, %9 : vector<32x96xf32>
    %cst_6 = arith.constant 0.000000e+00 : f32
    %11 = vector.shape_cast %5 : vector<1x96xi1> to vector<1x96xi1>
    %12 = vector.broadcast %11 : vector<1x96xi1> to vector<32x96xi1>
    %13 = vector.broadcast %cst_6 : f32 to vector<32x96xf32>
    %14 = arith.select %12, %10, %13 : vector<32x96xi1>, vector<32x96xf32>
    %c0_7 = arith.constant 0 : index
    %c0_8 = arith.constant 0 : index
    %15 = vector.load %arg1[%c0_7, %c0_8] : memref<32x32xbf16, #tpu.memory_space<vmem>>, vector<32x32xbf16>
    %16 = arith.truncf %3 : vector<32x96xf32> to vector<32x96xbf16>
    %cst_9 = arith.constant dense<0.000000e+00> : vector<32x96xf32>
    %17 = tpu.matmul %15, %16, %cst_9 {dimension_numbers = #tpu.dot_dimension_numbers<[1], [0], [0], [1], [0, 0, 1, 1], [], []>} : vector<32x32xbf16>, vector<32x96xbf16>, vector<32x96xf32> -> vector<32x96xf32>
    %cst_10 = arith.constant dense<0.000000e+00> : vector<96xf32>
    %18 = vector.multi_reduction <add>, %17, %cst_10 [0] : vector<32x96xf32> to vector<96xf32>
    %19 = vector.shape_cast %18 : vector<96xf32> to vector<1x96xf32>
    %cst_11 = arith.constant 3.200000e+01 : f32
    %20 = vector.broadcast %cst_11 : f32 to vector<1x96xf32>
    %21 = arith.divf %19, %20 : vector<1x96xf32>
    %22 = arith.mulf %17, %17 : vector<32x96xf32>
    %cst_12 = arith.constant dense<0.000000e+00> : vector<96xf32>
    %23 = vector.multi_reduction <add>, %22, %cst_12 [0] : vector<32x96xf32> to vector<96xf32>
    %24 = vector.shape_cast %23 : vector<96xf32> to vector<1x96xf32>
    %cst_13 = arith.constant 3.200000e+01 : f32
    %25 = vector.broadcast %cst_13 : f32 to vector<1x96xf32>
    %26 = arith.divf %24, %25 : vector<1x96xf32>
    %27 = arith.mulf %21, %21 : vector<1x96xf32>
    %28 = arith.subf %26, %27 : vector<1x96xf32>
    %29 = vector.broadcast %21 : vector<1x96xf32> to vector<32x96xf32>
    %30 = arith.subf %17, %29 : vector<32x96xf32>
    %cst_14 = arith.constant 9.99999974E-6 : f32
    %31 = vector.broadcast %cst_14 : f32 to vector<1x96xf32>
    %32 = arith.addf %28, %31 : vector<1x96xf32>
    %33 = math.rsqrt %32 : vector<1x96xf32>
    %34 = vector.broadcast %33 : vector<1x96xf32> to vector<32x96xf32>
    %35 = arith.mulf %30, %34 : vector<32x96xf32>
    %c1 = arith.constant 1 : index
    %c0_15 = arith.constant 0 : index
    %36 = vector.load %arg4[%c1, %c0_15] : memref<3x96xf32, #tpu.memory_space<vmem>>, vector<1x96xf32>
    %37 = vector.broadcast %36 : vector<1x96xf32> to vector<32x96xf32>
    %38 = arith.mulf %35, %37 : vector<32x96xf32>
    %c1_16 = arith.constant 1 : index
    %c0_17 = arith.constant 0 : index
    %39 = vector.load %arg5[%c1_16, %c0_17] : memref<3x96xf32, #tpu.memory_space<vmem>>, vector<1x96xf32>
    %40 = vector.broadcast %39 : vector<1x96xf32> to vector<32x96xf32>
    %41 = arith.addf %38, %40 : vector<32x96xf32>
    %c32_i32_18 = arith.constant 32 : i32
    %42 = vector.broadcast %c32_i32_18 : i32 to vector<1x96xi32>
    %43 = arith.cmpi sge, %0, %42 : vector<1x96xi32>
    %c64_i32 = arith.constant 64 : i32
    %44 = vector.broadcast %c64_i32 : i32 to vector<1x96xi32>
    %45 = arith.cmpi slt, %0, %44 : vector<1x96xi32>
    %46 = arith.andi %43, %45 : vector<1x96xi1>
    %cst_19 = arith.constant 0.000000e+00 : f32
    %47 = vector.broadcast %cst_19 : f32 to vector<32x96xf32>
    %48 = arith.maximumf %41, %47 : vector<32x96xf32>
    %49 = vector.shape_cast %46 : vector<1x96xi1> to vector<1x96xi1>
    %50 = vector.broadcast %49 : vector<1x96xi1> to vector<32x96xi1>
    %51 = arith.select %50, %48, %14 : vector<32x96xi1>, vector<32x96xf32>
    %c0_20 = arith.constant 0 : index
    %c0_21 = arith.constant 0 : index
    %52 = vector.load %arg1[%c0_20, %c0_21] : memref<32x32xbf16, #tpu.memory_space<vmem>>, vector<32x32xbf16>
    %53 = arith.truncf %17 : vector<32x96xf32> to vector<32x96xbf16>
    %cst_22 = arith.constant dense<0.000000e+00> : vector<32x96xf32>
    %54 = tpu.matmul %52, %53, %cst_22 {dimension_numbers = #tpu.dot_dimension_numbers<[1], [0], [0], [1], [0, 0, 1, 1], [], []>} : vector<32x32xbf16>, vector<32x96xbf16>, vector<32x96xf32> -> vector<32x96xf32>
    %cst_23 = arith.constant dense<0.000000e+00> : vector<96xf32>
    %55 = vector.multi_reduction <add>, %54, %cst_23 [0] : vector<32x96xf32> to vector<96xf32>
    %56 = vector.shape_cast %55 : vector<96xf32> to vector<1x96xf32>
    %cst_24 = arith.constant 3.200000e+01 : f32
    %57 = vector.broadcast %cst_24 : f32 to vector<1x96xf32>
    %58 = arith.divf %56, %57 : vector<1x96xf32>
    %59 = arith.mulf %54, %54 : vector<32x96xf32>
    %cst_25 = arith.constant dense<0.000000e+00> : vector<96xf32>
    %60 = vector.multi_reduction <add>, %59, %cst_25 [0] : vector<32x96xf32> to vector<96xf32>
    %61 = vector.shape_cast %60 : vector<96xf32> to vector<1x96xf32>
    %cst_26 = arith.constant 3.200000e+01 : f32
    %62 = vector.broadcast %cst_26 : f32 to vector<1x96xf32>
    %63 = arith.divf %61, %62 : vector<1x96xf32>
    %64 = arith.mulf %58, %58 : vector<1x96xf32>
    %65 = arith.subf %63, %64 : vector<1x96xf32>
    %66 = vector.broadcast %58 : vector<1x96xf32> to vector<32x96xf32>
    %67 = arith.subf %54, %66 : vector<32x96xf32>
    %cst_27 = arith.constant 9.99999974E-6 : f32
    %68 = vector.broadcast %cst_27 : f32 to vector<1x96xf32>
    %69 = arith.addf %65, %68 : vector<1x96xf32>
    %70 = math.rsqrt %69 : vector<1x96xf32>
    %71 = vector.broadcast %70 : vector<1x96xf32> to vector<32x96xf32>
    %72 = arith.mulf %67, %71 : vector<32x96xf32>
    %c2 = arith.constant 2 : index
    %c0_28 = arith.constant 0 : index
    %73 = vector.load %arg4[%c2, %c0_28] : memref<3x96xf32, #tpu.memory_space<vmem>>, vector<1x96xf32>
    %74 = vector.broadcast %73 : vector<1x96xf32> to vector<32x96xf32>
    %75 = arith.mulf %72, %74 : vector<32x96xf32>
    %c2_29 = arith.constant 2 : index
    %c0_30 = arith.constant 0 : index
    %76 = vector.load %arg5[%c2_29, %c0_30] : memref<3x96xf32, #tpu.memory_space<vmem>>, vector<1x96xf32>
    %77 = vector.broadcast %76 : vector<1x96xf32> to vector<32x96xf32>
    %78 = arith.addf %75, %77 : vector<32x96xf32>
    %c64_i32_31 = arith.constant 64 : i32
    %79 = vector.broadcast %c64_i32_31 : i32 to vector<1x96xi32>
    %80 = arith.cmpi sge, %0, %79 : vector<1x96xi32>
    %c96_i32 = arith.constant 96 : i32
    %81 = vector.broadcast %c96_i32 : i32 to vector<1x96xi32>
    %82 = arith.cmpi slt, %0, %81 : vector<1x96xi32>
    %83 = arith.andi %80, %82 : vector<1x96xi1>
    %cst_32 = arith.constant 0.000000e+00 : f32
    %84 = vector.broadcast %cst_32 : f32 to vector<32x96xf32>
    %85 = arith.maximumf %78, %84 : vector<32x96xf32>
    %86 = vector.shape_cast %83 : vector<1x96xi1> to vector<1x96xi1>
    %87 = vector.broadcast %86 : vector<1x96xi1> to vector<32x96xi1>
    %88 = arith.select %87, %85, %51 : vector<32x96xi1>, vector<32x96xf32>
    %89 = vector.shape_cast %88 : vector<32x96xf32> to vector<2x16x96xf32>
    %90 = vector.extract_strided_slice %89 {offsets = [0, 0, 0], sizes = [2, 1, 96], strides = [1, 1, 1]} : vector<2x16x96xf32> to vector<2x1x96xf32>
    %91 = vector.shape_cast %90 : vector<2x1x96xf32> to vector<2x96xf32>
    %92 = vector.extract_strided_slice %89 {offsets = [0, 1, 0], sizes = [2, 1, 96], strides = [1, 1, 1]} : vector<2x16x96xf32> to vector<2x1x96xf32>
    %93 = vector.shape_cast %92 : vector<2x1x96xf32> to vector<2x96xf32>
    %94 = vector.extract_strided_slice %89 {offsets = [0, 2, 0], sizes = [2, 1, 96], strides = [1, 1, 1]} : vector<2x16x96xf32> to vector<2x1x96xf32>
    %95 = vector.shape_cast %94 : vector<2x1x96xf32> to vector<2x96xf32>
    %96 = vector.extract_strided_slice %89 {offsets = [0, 3, 0], sizes = [2, 1, 96], strides = [1, 1, 1]} : vector<2x16x96xf32> to vector<2x1x96xf32>
    %97 = vector.shape_cast %96 : vector<2x1x96xf32> to vector<2x96xf32>
    %98 = vector.extract_strided_slice %89 {offsets = [0, 4, 0], sizes = [2, 1, 96], strides = [1, 1, 1]} : vector<2x16x96xf32> to vector<2x1x96xf32>
    %99 = vector.shape_cast %98 : vector<2x1x96xf32> to vector<2x96xf32>
    %100 = vector.extract_strided_slice %89 {offsets = [0, 5, 0], sizes = [2, 1, 96], strides = [1, 1, 1]} : vector<2x16x96xf32> to vector<2x1x96xf32>
    %101 = vector.shape_cast %100 : vector<2x1x96xf32> to vector<2x96xf32>
    %102 = vector.extract_strided_slice %89 {offsets = [0, 6, 0], sizes = [2, 1, 96], strides = [1, 1, 1]} : vector<2x16x96xf32> to vector<2x1x96xf32>
    %103 = vector.shape_cast %102 : vector<2x1x96xf32> to vector<2x96xf32>
    %104 = vector.extract_strided_slice %89 {offsets = [0, 7, 0], sizes = [2, 1, 96], strides = [1, 1, 1]} : vector<2x16x96xf32> to vector<2x1x96xf32>
    %105 = vector.shape_cast %104 : vector<2x1x96xf32> to vector<2x96xf32>
    %106 = vector.extract_strided_slice %89 {offsets = [0, 8, 0], sizes = [2, 1, 96], strides = [1, 1, 1]} : vector<2x16x96xf32> to vector<2x1x96xf32>
    %107 = vector.shape_cast %106 : vector<2x1x96xf32> to vector<2x96xf32>
    %108 = vector.extract_strided_slice %89 {offsets = [0, 9, 0], sizes = [2, 1, 96], strides = [1, 1, 1]} : vector<2x16x96xf32> to vector<2x1x96xf32>
    %109 = vector.shape_cast %108 : vector<2x1x96xf32> to vector<2x96xf32>
    %110 = vector.extract_strided_slice %89 {offsets = [0, 10, 0], sizes = [2, 1, 96], strides = [1, 1, 1]} : vector<2x16x96xf32> to vector<2x1x96xf32>
    %111 = vector.shape_cast %110 : vector<2x1x96xf32> to vector<2x96xf32>
    %112 = vector.extract_strided_slice %89 {offsets = [0, 11, 0], sizes = [2, 1, 96], strides = [1, 1, 1]} : vector<2x16x96xf32> to vector<2x1x96xf32>
    %113 = vector.shape_cast %112 : vector<2x1x96xf32> to vector<2x96xf32>
    %114 = vector.extract_strided_slice %89 {offsets = [0, 12, 0], sizes = [2, 1, 96], strides = [1, 1, 1]} : vector<2x16x96xf32> to vector<2x1x96xf32>
    %115 = vector.shape_cast %114 : vector<2x1x96xf32> to vector<2x96xf32>
    %116 = vector.extract_strided_slice %89 {offsets = [0, 13, 0], sizes = [2, 1, 96], strides = [1, 1, 1]} : vector<2x16x96xf32> to vector<2x1x96xf32>
    %117 = vector.shape_cast %116 : vector<2x1x96xf32> to vector<2x96xf32>
    %118 = vector.extract_strided_slice %89 {offsets = [0, 14, 0], sizes = [2, 1, 96], strides = [1, 1, 1]} : vector<2x16x96xf32> to vector<2x1x96xf32>
    %119 = vector.shape_cast %118 : vector<2x1x96xf32> to vector<2x96xf32>
    %120 = vector.extract_strided_slice %89 {offsets = [0, 15, 0], sizes = [2, 1, 96], strides = [1, 1, 1]} : vector<2x16x96xf32> to vector<2x1x96xf32>
    %121 = vector.shape_cast %120 : vector<2x1x96xf32> to vector<2x96xf32>
    %122 = tpu.concatenate %91, %93, %95, %97, %99, %101, %103, %105, %107, %109, %111, %113, %115, %117, %119, %121 in 1 : vector<2x96xf32>, vector<2x96xf32>, vector<2x96xf32>, vector<2x96xf32>, vector<2x96xf32>, vector<2x96xf32>, vector<2x96xf32>, vector<2x96xf32>, vector<2x96xf32>, vector<2x96xf32>, vector<2x96xf32>, vector<2x96xf32>, vector<2x96xf32>, vector<2x96xf32>, vector<2x96xf32>, vector<2x96xf32> -> vector<2x1536xf32>
    %123 = arith.truncf %122 : vector<2x1536xf32> to vector<2x1536xbf16>
    %c0_33 = arith.constant 0 : index
    %c0_34 = arith.constant 0 : index
    %124 = vector.load %arg6[%c0_33, %c0_34] : memref<256x1536xbf16, #tpu.memory_space<vmem>>, vector<256x1536xbf16>
    %cst_35 = arith.constant dense<0.000000e+00> : vector<2x256xf32>
    %125 = tpu.matmul %123, %124, %cst_35 {dimension_numbers = #tpu.dot_dimension_numbers<[1], [1], [0], [0], [0, 0, 1, 0], [], []>} : vector<2x1536xbf16>, vector<256x1536xbf16>, vector<2x256xf32> -> vector<2x256xf32>
    %c0_36 = arith.constant 0 : index
    %c0_37 = arith.constant 0 : index
    %126 = vector.load %arg7[%c0_36, %c0_37] : memref<1x256xf32, #tpu.memory_space<vmem>>, vector<1x256xf32>
    %127 = vector.broadcast %126 : vector<1x256xf32> to vector<2x256xf32>
    %128 = arith.addf %125, %127 : vector<2x256xf32>
    %cst_38 = arith.constant 0.000000e+00 : f32
    %129 = vector.broadcast %cst_38 : f32 to vector<2x256xf32>
    %130 = arith.maximumf %128, %129 : vector<2x256xf32>
    %131 = arith.truncf %130 : vector<2x256xf32> to vector<2x256xbf16>
    %c0_39 = arith.constant 0 : index
    %c0_40 = arith.constant 0 : index
    %132 = vector.load %arg8[%c0_39, %c0_40] : memref<128x256xbf16, #tpu.memory_space<vmem>>, vector<128x256xbf16>
    %cst_41 = arith.constant dense<0.000000e+00> : vector<2x128xf32>
    %133 = tpu.matmul %131, %132, %cst_41 {dimension_numbers = #tpu.dot_dimension_numbers<[1], [1], [0], [0], [0, 0, 1, 0], [], []>} : vector<2x256xbf16>, vector<128x256xbf16>, vector<2x128xf32> -> vector<2x128xf32>
    %c0_42 = arith.constant 0 : index
    %c0_43 = arith.constant 0 : index
    %134 = vector.load %arg9[%c0_42, %c0_43] : memref<1x128xf32, #tpu.memory_space<vmem>>, vector<1x128xf32>
    %135 = vector.broadcast %134 : vector<1x128xf32> to vector<2x128xf32>
    %136 = arith.addf %133, %135 : vector<2x128xf32>
    %c0_44 = arith.constant 0 : index
    %c0_45 = arith.constant 0 : index
    %137 = vector.load %arg10[%c0_44, %c0_45] : memref<2x128xf32, #tpu.memory_space<vmem>>, vector<2x128xf32>
    tpu.vector_store %arg10[%c0_44, %c0_45], %136 {strides = array<i32>} : memref<2x128xf32, #tpu.memory_space<vmem>>, vector<2x128xf32>,
    return
  }
}

</mosaic_0001>

<llo_original>
// kernel: dcnn_forward.1
$region0: #{dcnn_forward.1}
  #allocation0 [shape = 'u32[]', space=smem, size = 0x4, offset = 0x4, fixed_abs, tag = 'smem constant byte address 0x4 - core index']
  #allocation1 [shape = 'u32[144,128]{1,0:T(1,128)}', space=vmem, size = 0x12000, scoped, tag = 'internal scratch']
  %s0 = inlined_call_operand.vmem [shape: bf16[32,64], index: 0, kind: input, shape index: {}]
  %s1 = inlined_call_operand.vmem [shape: bf16[32,32], index: 1, kind: input, shape index: {}]
  %s2 = inlined_call_operand.vmem [shape: bf16[96,64], index: 2, kind: input, shape index: {}]
  %s3 = inlined_call_operand.vmem [shape: f32[1,96], index: 3, kind: input, shape index: {}]
  %s4 = inlined_call_operand.vmem [shape: f32[3,96], index: 4, kind: input, shape index: {}]
  %s5 = inlined_call_operand.vmem [shape: f32[3,96], index: 5, kind: input, shape index: {}]
  %s6 = inlined_call_operand.vmem [shape: bf16[256,1536], index: 6, kind: input, shape index: {}]
  %s7 = inlined_call_operand.vmem [shape: f32[1,256], index: 7, kind: input, shape index: {}]
  %s8 = inlined_call_operand.vmem [shape: bf16[128,256], index: 8, kind: input, shape index: {}]
  %s9 = inlined_call_operand.vmem [shape: f32[1,128], index: 9, kind: input, shape index: {}]
  %s10 = inlined_call_operand.hbm [shape: f32[2,128], index: 10, kind: output, shape index: {}]
  %s11 = sld [smem:[#allocation0]]
  $region50: #{dcnn_forward.1} parent=0
    _
  %s13 = ssub.s32 1, %s11
  %s14 = scalar_select 0, %s13, %s11
  $region1: #{dcnn_forward.1} parent=0
    #allocation2 [shape = 'u8[1024]{0}', space=vmem, size = 0x400, scoped, tag = 'output window, operand 0, single buffered']
    #allocation3 [shape = 's32[1]{0}', space=sflag, size = 0x4, scoped, tag = 'scoped memory for dcnn_forward.1']
    %15 = vsyncpa [#allocation3], 0
    // Predicated region
    $region2: #{dcnn_forward.1} parent=1 // pred_check
      _
    $region3: #{dcnn_forward.1} parent=1 // pred_check_branch
      %17 = sbr.rel (0) target = $region5
    $region4: #{dcnn_forward.1} parent=1 // pred_region
      _
    $region5: #{dcnn_forward.1} parent=1 // pred_fallthru
      _
    // Predicated region
    $region6: #{dcnn_forward.1} parent=1 // pred_check
      _
    $region7: #{dcnn_forward.1} parent=1 // pred_check_branch
      %19 = sbr.rel (0) target = $region9
    $region8: #{dcnn_forward.1} parent=1 // pred_region
      _
    $region9: #{dcnn_forward.1} parent=1 // pred_fallthru
      _
    // Predicated region
    $region10: #{dcnn_forward.1} parent=1 // pred_check
      _
    $region11: #{dcnn_forward.1} parent=1 // pred_check_branch
      %21 = sbr.rel (0) target = $region13
    $region12: #{dcnn_forward.1} parent=1 // pred_region
      _
    $region13: #{dcnn_forward.1} parent=1 // pred_fallthru
      _
    // Predicated region
    $region14: #{dcnn_forward.1} parent=1 // pred_check
      _
    $region15: #{dcnn_forward.1} parent=1 // pred_check_branch
      %23 = sbr.rel (0) target = $region17
    $region16: #{dcnn_forward.1} parent=1 // pred_region
      _
    $region17: #{dcnn_forward.1} parent=1 // pred_fallthru
      _
    // Predicated region
    $region18: #{dcnn_forward.1} parent=1 // pred_check
      _
    $region19: #{dcnn_forward.1} parent=1 // pred_check_branch
      %25 = sbr.rel (0) target = $region21
    $region20: #{dcnn_forward.1} parent=1 // pred_region
      _
    $region21: #{dcnn_forward.1} parent=1 // pred_fallthru
      _
    // Predicated region
    $region22: #{dcnn_forward.1} parent=1 // pred_check
      _
    $region23: #{dcnn_forward.1} parent=1 // pred_check_branch
      %27 = sbr.rel (0) target = $region25
    $region24: #{dcnn_forward.1} parent=1 // pred_region
      _
    $region25: #{dcnn_forward.1} parent=1 // pred_fallthru
      _
    // Predicated region
    $region26: #{dcnn_forward.1} parent=1 // pred_check
      _
    $region27: #{dcnn_forward.1} parent=1 // pred_check_branch
      %29 = sbr.rel (0) target = $region29
    $region28: #{dcnn_forward.1} parent=1 // pred_region
      _
    $region29: #{dcnn_forward.1} parent=1 // pred_fallthru
      _
    // Predicated region
    $region30: #{dcnn_forward.1} parent=1 // pred_check
      _
    $region31: #{dcnn_forward.1} parent=1 // pred_check_branch
      %31 = sbr.rel (0) target = $region33
    $region32: #{dcnn_forward.1} parent=1 // pred_region
      _
    $region33: #{dcnn_forward.1} parent=1 // pred_fallthru
      _
    // Predicated region
    $region34: #{dcnn_forward.1} parent=1 // pred_check
      _
    $region35: #{dcnn_forward.1} parent=1 // pred_check_branch
      %33 = sbr.rel (0) target = $region37
    $region36: #{dcnn_forward.1} parent=1 // pred_region
      _
    $region37: #{dcnn_forward.1} parent=1 // pred_fallthru
      _
    // Predicated region
    $region38: #{dcnn_forward.1} parent=1 // pred_check
      _
    $region39: #{dcnn_forward.1} parent=1 // pred_check_branch
      %35 = sbr.rel (0) target = $region41
    $region40: #{dcnn_forward.1} parent=1 // pred_region
      _
    $region41: #{dcnn_forward.1} parent=1 // pred_fallthru
      _
    %v37 = vlaneseq
    %v38 = vand.u32 %v37, 127
    %v39 = vld [vmem:[%s0] sm:$0xf]
    %v40 = vld [vmem:[%s0 + $0x4] sm:$0xf]
    %v41 = vld [vmem:[%s0 + $0x8] sm:$0xf]
    %v42 = vld [vmem:[%s0 + $0xc] sm:$0xf]
    %v43 = vld [vmem:[%s2] sm:$0xf]
    %v44 = vld [vmem:[%s2 + $0x4] sm:$0xf]
    %v45 = vld [vmem:[%s2 + $0x8] sm:$0xf]
    %v46 = vld [vmem:[%s2 + $0xc] sm:$0xf]
    %v47 = vld [vmem:[%s2 + $0x10] sm:$0xf]
    %v48 = vld [vmem:[%s2 + $0x14] sm:$0xf]
    %v49 = vld [vmem:[%s2 + $0x18] sm:$0xf]
    %v50 = vld [vmem:[%s2 + $0x1c] sm:$0xf]
    %v51 = vld [vmem:[%s2 + $0x20] sm:$0xf]
    %v52 = vld [vmem:[%s2 + $0x24] sm:$0xf]
    %v53 = vld [vmem:[%s2 + $0x28] sm:$0xf]
    %v54 = vld [vmem:[%s2 + $0x2c] sm:$0xf]
    %v59 = vunpack.c.l.b16 %v39
    %v60 = vunpack.c.l.b16 %v40
    %v61 = vunpack.c.l.b16 %v41
    %v62 = vunpack.c.l.b16 %v42
    %v63 = vpack.c.b16 %v60, %v59
    %v64 = vpack.c.b16 %v62, %v61
    %v77 = vunpack.c.l.b16 %v43
    %v78 = vunpack.c.l.b16 %v44
    %v79 = vunpack.c.l.b16 %v45
    %v80 = vunpack.c.l.b16 %v46
    %v81 = vunpack.c.l.b16 %v47
    %v82 = vunpack.c.l.b16 %v48
    %v83 = vunpack.c.l.b16 %v49
    %v84 = vunpack.c.l.b16 %v50
    %v85 = vunpack.c.l.b16 %v51
    %v86 = vunpack.c.l.b16 %v52
    %v87 = vunpack.c.l.b16 %v53
    %v88 = vunpack.c.l.b16 %v54
    %v89 = vpack.c.b16 %v78, %v77
    %v90 = vpack.c.b16 %v80, %v79
    %v91 = vpack.c.b16 %v82, %v81
    %v92 = vpack.c.b16 %v84, %v83
    %v93 = vpack.c.b16 %v86, %v85
    %v94 = vpack.c.b16 %v88, %v87
    %vm95 = vcmask 523264
    %v97 = vsel %vm95, %v63, 0
    %v100 = vsel %vm95, %v64, 0
    %v103 = vsel %vm95, %v89, 0
    %v106 = vsel %vm95, %v90, 0
    %v109 = vsel %vm95, %v91, 0
    %v112 = vsel %vm95, %v92, 0
    %v115 = vsel %vm95, %v93, 0
    %v118 = vsel %vm95, %v94, 0
    %120 = vmatprep.subr.bf16.mxu0 0
    %121 = vmatpush1.bf16.xpose.msra.mxu0 %v103
    %122 = vmatprep.subr.bf16.mxu0 0
    %123 = vmatpush1.bf16.xpose.msra.mxu0 %v106
    %124 = vmatprep.subr.bf16.mxu0 0
    %125 = vmatpush1.bf16.xpose.msra.mxu0 %v109
    %126 = vmatprep.subr.bf16.mxu0 0
    %127 = vmatpush1.bf16.xpose.msra.mxu0 %v112
    %128 = vmatprep.subr.bf16.mxu0 0
    %129 = vmatpush1.bf16.xpose.msra.mxu0 %v115
    %130 = vmatprep.subr.bf16.mxu0 0
    %131 = vmatpush1.bf16.xpose.msra.mxu0 %v118
    %132 = vmatprep.subr.bf16.mxu0 0
    %133 = vmatpush1.bf16.xpose.msra.mxu0 0
    %134 = vmatprep.subr.bf16.mxu0 0
    %135 = vmatpush1.bf16.xpose.msra.mxu0 0
    %136 = vmatprep.subr.bf16.mxu0 0
    %137 = vmatpush1.bf16.xpose.msra.mxu0 0
    %138 = vmatprep.subr.bf16.mxu0 0
    %139 = vmatpush1.bf16.xpose.msra.mxu0 0
    %140 = vmatprep.subr.bf16.mxu0 0
    %141 = vmatpush1.bf16.xpose.msra.mxu0 0
    %142 = vmatprep.subr.bf16.mxu0 0
    %143 = vmatpush1.bf16.xpose.msra.mxu0 0
    %144 = vmatprep.subr.bf16.mxu0 0
    %145 = vmatpush1.bf16.xpose.msra.mxu0 0
    %146 = vmatprep.subr.bf16.mxu0 0
    %147 = vmatpush1.bf16.xpose.msra.mxu0 0
    %148 = vmatprep.subr.bf16.mxu0 0
    %149 = vmatpush1.bf16.xpose.msra.mxu0 0
    %150 = vmatprep.subr.bf16.mxu0 0
    %151 = vmatpush1.bf16.xpose.msra.mxu0 0
    %152 = vmatprep.mubr.bf16.mxu0 0
    %153 = vmatmul.mubr.bf16.gmra.mrb[0].mxu0 %v97
    %v154 = vpop.f32.mrb[0].mxu0
    %v155 = vadd.f32 0.0, %v154
    %v156 = vpop.f32.mrb[0].mxu0
    %v157 = vpop.f32.mrb[0].mxu0
    %v158 = vadd.f32 0.0, %v157
    %v159 = vpop.f32.mrb[0].mxu0
    %160 = vmatprep.mubr.bf16.mxu0 0
    %161 = vmatmul.mubr.bf16.gmra.mrb[0].mxu0 %v100
    %v162 = vpop.f32.mrb[0].mxu0
    %v163 = vadd.f32 0.0, %v162
    %v164 = vpop.f32.mrb[0].mxu0
    %v165 = vpop.f32.mrb[0].mxu0
    %v166 = vadd.f32 0.0, %v165
    %v167 = vpop.f32.mrb[0].mxu0
    %168 = vdwg.mxu0
    %vm169 = vcmp.lt.s32.totalorder %v38, 32
    %v170 = vld [vmem:[%s3] sm:$0x1]
    %v172 = vlaneseq
    %v173 = vshrl.u32 %v172, 7
    %v174 = vsub.s32 0, %v173
    %v175 = vrot.slane %v170, %v174
    %v177 = vadd.f32 %v155, %v175
    %v178 = vadd.f32 %v158, %v175
    %v179 = vadd.f32 %v163, %v175
    %v180 = vadd.f32 %v166, %v175
    %v181 = vmax.f32 %v177, 0.0
    %v182 = vmax.f32 %v178, 0.0
    %v183 = vmax.f32 %v179, 0.0
    %v184 = vmax.f32 %v180, 0.0
    %v185 = vsel %vm169, 1, 0
    %vm186 = vcmp.eq.s32.totalorder %v185, 1
    %v187 = vsel %vm186, %v181, 0.0
    %v188 = vsel %vm186, %v182, 0.0
    %v189 = vsel %vm186, %v183, 0.0
    %v190 = vsel %vm186, %v184, 0.0
    %v191 = vld [vmem:[%s1] sm:$0xf]
    %v192 = vld [vmem:[%s1 + $0x4] sm:$0xf]
    %v193 = vld [vmem:[%s1 + $0x8] sm:$0xf]
    %v194 = vld [vmem:[%s1 + $0xc] sm:$0xf]
    %v195 = vpack.c.bf16 %v158, %v155
    %v196 = vpack.c.bf16 %v166, %v163
    %v201 = vunpack.c.l.b16 %v191
    %v202 = vunpack.c.l.b16 %v192
    %v203 = vunpack.c.l.b16 %v193
    %v204 = vunpack.c.l.b16 %v194
    %v205 = vpack.c.b16 %v202, %v201
    %v206 = vpack.c.b16 %v204, %v203
    %vm207 = vcmask 261120
    %v209 = vsel %vm207, %v205, 0
    %v212 = vsel %vm207, %v206, 0
    %214 = vmatprep.subr.bf16.mxu0 0
    %215 = vmatpush1.bf16.msra.mxu0 %v195
    %216 = vmatprep.subr.bf16.mxu0 0
    %217 = vmatpush1.bf16.msra.mxu0 %v196
    %218 = vmatprep.subr.bf16.mxu0 0
    %219 = vmatpush1.bf16.msra.mxu0 0
    %220 = vmatprep.subr.bf16.mxu0 0
    %221 = vmatpush1.bf16.msra.mxu0 0
    %222 = vmatprep.subr.bf16.mxu0 0
    %223 = vmatpush1.bf16.msra.mxu0 0
    %224 = vmatprep.subr.bf16.mxu0 0
    %225 = vmatpush1.bf16.msra.mxu0 0
    %226 = vmatprep.subr.bf16.mxu0 0
    %227 = vmatpush1.bf16.msra.mxu0 0
    %228 = vmatprep.subr.bf16.mxu0 0
    %229 = vmatpush1.bf16.msra.mxu0 0
    %230 = vmatprep.subr.bf16.mxu0 0
    %231 = vmatpush1.bf16.msra.mxu0 0
    %232 = vmatprep.subr.bf16.mxu0 0
    %233 = vmatpush1.bf16.msra.mxu0 0
    %234 = vmatprep.subr.bf16.mxu0 0
    %235 = vmatpush1.bf16.msra.mxu0 0
    %236 = vmatprep.subr.bf16.mxu0 0
    %237 = vmatpush1.bf16.msra.mxu0 0
    %238 = vmatprep.subr.bf16.mxu0 0
    %239 = vmatpush1.bf16.msra.mxu0 0
    %240 = vmatprep.subr.bf16.mxu0 0
    %241 = vmatpush1.bf16.msra.mxu0 0
    %242 = vmatprep.subr.bf16.mxu0 0
    %243 = vmatpush1.bf16.msra.mxu0 0
    %244 = vmatprep.subr.bf16.mxu0 0
    %245 = vmatpush1.bf16.msra.mxu0 0
    %246 = vmatprep.mubr.bf16.mxu0 0
    %247 = vmatmul.mubr.bf16.gmra.mrb[0].mxu0 %v209
    %v248 = vpop.f32.mrb[0].mxu0
    %v249 = vadd.f32 0.0, %v248
    %v250 = vpop.f32.mrb[0].mxu0
    %v251 = vpop.f32.mrb[0].mxu0
    %v252 = vadd.f32 0.0, %v251
    %v253 = vpop.f32.mrb[0].mxu0
    %254 = vmatprep.mubr.bf16.mxu0 0
    %255 = vmatmul.mubr.bf16.gmra.mrb[0].mxu0 %v212
    %v256 = vpop.f32.mrb[0].mxu0
    %v257 = vadd.f32 0.0, %v256
    %v258 = vpop.f32.mrb[0].mxu0
    %v259 = vpop.f32.mrb[0].mxu0
    %v260 = vadd.f32 0.0, %v259
    %v261 = vpop.f32.mrb[0].mxu0
    %262 = vdwg.mxu0
    %vm263 = vcmask 785408
    %v264 = vsel %vm263, %v249, 0.0
    %v265 = vsel %vm263, %v252, 0.0
    %v266 = vadd.f32 %v264, %v265
    %v267 = vsel %vm263, %v257, 0.0
    %v268 = vadd.f32 %v266, %v267
    %v269 = vsel %vm263, %v260, 0.0
    %v270 = vadd.f32 %v268, %v269
    %v271 = vrot.slane %v270, 4
    %v272 = vadd.f32 %v270, %v271
    %v273 = vrot.slane %v272, 2
    %v274 = vadd.f32 %v272, %v273
    %v275 = vrot.slane %v274, 1
    %v276 = vadd.f32 %v274, %v275
    %v277 = vrcp.pop 32.0
    %v278 = vmul.f32 %v276, %v277
    %v279 = vmul.f32 %v249, %v249
    %v280 = vmul.f32 %v252, %v252
    %v281 = vmul.f32 %v257, %v257
    %v282 = vmul.f32 %v260, %v260
    %v283 = vsel %vm263, %v279, 0.0
    %v284 = vsel %vm263, %v280, 0.0
    %v285 = vadd.f32 %v283, %v284
    %v286 = vsel %vm263, %v281, 0.0
    %v287 = vadd.f32 %v285, %v286
    %v288 = vsel %vm263, %v282, 0.0
    %v289 = vadd.f32 %v287, %v288
    %v290 = vrot.slane %v289, 4
    %v291 = vadd.f32 %v289, %v290
    %v292 = vrot.slane %v291, 2
    %v293 = vadd.f32 %v291, %v292
    %v294 = vrot.slane %v293, 1
    %v295 = vadd.f32 %v293, %v294
    %v296 = vmul.f32 %v295, %v277
    %v297 = vmul.f32 %v278, %v278
    %v298 = vsub.f32 %v296, %v297
    %v299 = vsub.f32 %v249, %v278
    %v300 = vsub.f32 %v252, %v278
    %v301 = vsub.f32 %v257, %v278
    %v302 = vsub.f32 %v260, %v278
    %v303 = vadd.f32 %v298, 1e-05
    %v304 = vrsqrt.pop %v303
    %v305 = vmul.f32 %v299, %v304
    %v306 = vmul.f32 %v300, %v304
    %v307 = vmul.f32 %v301, %v304
    %v308 = vmul.f32 %v302, %v304
    %v309 = vld [vmem:[%s4 + $0x1] sm:$0x1]
    %v310 = vlaneseq
    %v311 = vshrl.u32 %v310, 7
    %v312 = vsub.s32 0, %v311
    %v313 = vrot.slane %v309, %v312
    %v314 = vmul.f32 %v305, %v313
    %v315 = vmul.f32 %v306, %v313
    %v316 = vmul.f32 %v307, %v313
    %v317 = vmul.f32 %v308, %v313
    %v318 = vld [vmem:[%s5 + $0x1] sm:$0x1]
    %v319 = vlaneseq
    %v320 = vshrl.u32 %v319, 7
    %v321 = vsub.s32 0, %v320
    %v322 = vrot.slane %v318, %v321
    %v323 = vadd.f32 %v314, %v322
    %v324 = vadd.f32 %v315, %v322
    %v325 = vadd.f32 %v316, %v322
    %v326 = vadd.f32 %v317, %v322
    %vm327 = vcmp.ge.s32.totalorder %v38, 32
    %vm328 = vcmp.lt.s32.totalorder %v38, 64
    %vm329 = vmand %vm327, %vm328
    %v330 = vmax.f32 %v323, 0.0
    %v331 = vmax.f32 %v324, 0.0
    %v332 = vmax.f32 %v325, 0.0
    %v333 = vmax.f32 %v326, 0.0
    %v334 = vsel %vm329, 1, 0
    %vm335 = vcmp.eq.s32.totalorder %v334, 1
    %v336 = vsel %vm335, %v330, %v187
    %v337 = vsel %vm335, %v331, %v188
    %v338 = vsel %vm335, %v332, %v189
    %v339 = vsel %vm335, %v333, %v190
    %v340 = vpack.c.bf16 %v252, %v249
    %v341 = vpack.c.bf16 %v260, %v257
    %342 = vmatprep.subr.bf16.mxu0 0
    %343 = vmatpush1.bf16.msra.mxu0 %v340
    %344 = vmatprep.subr.bf16.mxu0 0
    %345 = vmatpush1.bf16.msra.mxu0 %v341
    %346 = vmatprep.subr.bf16.mxu0 0
    %347 = vmatpush1.bf16.msra.mxu0 0
    %348 = vmatprep.subr.bf16.mxu0 0
    %349 = vmatpush1.bf16.msra.mxu0 0
    %350 = vmatprep.subr.bf16.mxu0 0
    %351 = vmatpush1.bf16.msra.mxu0 0
    %352 = vmatprep.subr.bf16.mxu0 0
    %353 = vmatpush1.bf16.msra.mxu0 0
    %354 = vmatprep.subr.bf16.mxu0 0
    %355 = vmatpush1.bf16.msra.mxu0 0
    %356 = vmatprep.subr.bf16.mxu0 0
    %357 = vmatpush1.bf16.msra.mxu0 0
    %358 = vmatprep.subr.bf16.mxu0 0
    %359 = vmatpush1.bf16.msra.mxu0 0
    %360 = vmatprep.subr.bf16.mxu0 0
    %361 = vmatpush1.bf16.msra.mxu0 0
    %362 = vmatprep.subr.bf16.mxu0 0
    %363 = vmatpush1.bf16.msra.mxu0 0
    %364 = vmatprep.subr.bf16.mxu0 0
    %365 = vmatpush1.bf16.msra.mxu0 0
    %366 = vmatprep.subr.bf16.mxu0 0
    %367 = vmatpush1.bf16.msra.mxu0 0
    %368 = vmatprep.subr.bf16.mxu0 0
    %369 = vmatpush1.bf16.msra.mxu0 0
    %370 = vmatprep.subr.bf16.mxu0 0
    %371 = vmatpush1.bf16.msra.mxu0 0
    %372 = vmatprep.subr.bf16.mxu0 0
    %373 = vmatpush1.bf16.msra.mxu0 0
    %374 = vmatprep.mubr.bf16.mxu0 0
    %375 = vmatmul.mubr.bf16.gmra.mrb[0].mxu0 %v209
    %v376 = vpop.f32.mrb[0].mxu0
    %v377 = vadd.f32 0.0, %v376
    %v378 = vpop.f32.mrb[0].mxu0
    %v379 = vpop.f32.mrb[0].mxu0
    %v380 = vadd.f32 0.0, %v379
    %v381 = vpop.f32.mrb[0].mxu0
    %382 = vmatprep.mubr.bf16.mxu0 0
    %383 = vmatmul.mubr.bf16.gmra.mrb[0].mxu0 %v212
    %v384 = vpop.f32.mrb[0].mxu0
    %v385 = vadd.f32 0.0, %v384
    %v386 = vpop.f32.mrb[0].mxu0
    %v387 = vpop.f32.mrb[0].mxu0
    %v388 = vadd.f32 0.0, %v387
    %v389 = vpop.f32.mrb[0].mxu0
    %390 = vdwg.mxu0
    %v391 = vsel %vm263, %v377, 0.0
    %v392 = vsel %vm263, %v380, 0.0
    %v393 = vadd.f32 %v391, %v392
    %v394 = vsel %vm263, %v385, 0.0
    %v395 = vadd.f32 %v393, %v394
    %v396 = vsel %vm263, %v388, 0.0
    %v397 = vadd.f32 %v395, %v396
    %v398 = vrot.slane %v397, 4
    %v399 = vadd.f32 %v397, %v398
    %v400 = vrot.slane %v399, 2
    %v401 = vadd.f32 %v399, %v400
    %v402 = vrot.slane %v401, 1
    %v403 = vadd.f32 %v401, %v402
    %v404 = vmul.f32 %v403, %v277
    %v405 = vmul.f32 %v377, %v377
    %v406 = vmul.f32 %v380, %v380
    %v407 = vmul.f32 %v385, %v385
    %v408 = vmul.f32 %v388, %v388
    %v409 = vsel %vm263, %v405, 0.0
    %v410 = vsel %vm263, %v406, 0.0
    %v411 = vadd.f32 %v409, %v410
    %v412 = vsel %vm263, %v407, 0.0
    %v413 = vadd.f32 %v411, %v412
    %v414 = vsel %vm263, %v408, 0.0
    %v415 = vadd.f32 %v413, %v414
    %v416 = vrot.slane %v415, 4
    %v417 = vadd.f32 %v415, %v416
    %v418 = vrot.slane %v417, 2
    %v419 = vadd.f32 %v417, %v418
    %v420 = vrot.slane %v419, 1
    %v421 = vadd.f32 %v419, %v420
    %v422 = vmul.f32 %v421, %v277
    %v423 = vmul.f32 %v404, %v404
    %v424 = vsub.f32 %v422, %v423
    %v425 = vsub.f32 %v377, %v404
    %v426 = vsub.f32 %v380, %v404
    %v427 = vsub.f32 %v385, %v404
    %v428 = vsub.f32 %v388, %v404
    %v429 = vadd.f32 %v424, 1e-05
    %v430 = vrsqrt.pop %v429
    %v431 = vmul.f32 %v425, %v430
    %v432 = vmul.f32 %v426, %v430
    %v433 = vmul.f32 %v427, %v430
    %v434 = vmul.f32 %v428, %v430
    %v435 = vld [vmem:[%s4 + $0x2] sm:$0x1]
    %v436 = vlaneseq
    %v437 = vshrl.u32 %v436, 7
    %v438 = vsub.s32 0, %v437
    %v439 = vrot.slane %v435, %v438
    %v440 = vmul.f32 %v431, %v439
    %v441 = vmul.f32 %v432, %v439
    %v442 = vmul.f32 %v433, %v439
    %v443 = vmul.f32 %v434, %v439
    %v444 = vld [vmem:[%s5 + $0x2] sm:$0x1]
    %v445 = vlaneseq
    %v446 = vshrl.u32 %v445, 7
    %v447 = vsub.s32 0, %v446
    %v448 = vrot.slane %v444, %v447
    %v449 = vadd.f32 %v440, %v448
    %v450 = vadd.f32 %v441, %v448
    %v451 = vadd.f32 %v442, %v448
    %v452 = vadd.f32 %v443, %v448
    %vm453 = vcmp.ge.s32.totalorder %v38, 64
    %vm454 = vcmp.lt.s32.totalorder %v38, 96
    %vm455 = vmand %vm453, %vm454
    %v456 = vmax.f32 %v449, 0.0
    %v457 = vmax.f32 %v450, 0.0
    %v458 = vmax.f32 %v451, 0.0
    %v459 = vmax.f32 %v452, 0.0
    %v460 = vsel %vm455, 1, 0
    %vm461 = vcmp.eq.s32.totalorder %v460, 1
    %v462 = vsel %vm461, %v456, %v336
    %v463 = vsel %vm461, %v457, %v337
    %v464 = vsel %vm461, %v458, %v338
    %v465 = vsel %vm461, %v459, %v339
    %v468 = vrot.slane %v464, 7
    %vm469 = vcmask 1041409
    %v470 = vsel %vm469, %v468, %v462
    %v472 = vrot.slane %v462, 1
    %v473 = vsel %vm469, %v464, %v472
    %474 = vrot.lane.b32.xlu0 %v473, 96
    %v475 = vpop.permute.xlu0 %474
    %v477 = vrot.slane %v462, 2
    %v478 = vrot.slane %v464, 1
    %v479 = vsel %vm469, %v478, %v477
    %480 = vrot.lane.b32.xlu0 %v479, 64
    %v481 = vpop.permute.xlu0 %480
    %v483 = vrot.slane %v462, 3
    %v484 = vrot.slane %v464, 2
    %v485 = vsel %vm469, %v484, %v483
    %486 = vrot.lane.b32.xlu0 %v485, 32
    %v487 = vpop.permute.xlu0 %486
    %v489 = vrot.slane %v462, 4
    %v490 = vrot.slane %v464, 3
    %v491 = vsel %vm469, %v490, %v489
    %v493 = vrot.slane %v462, 5
    %v494 = vrot.slane %v464, 4
    %v495 = vsel %vm469, %v494, %v493
    %496 = vrot.lane.b32.xlu0 %v495, 96
    %v497 = vpop.permute.xlu0 %496
    %v499 = vrot.slane %v462, 6
    %v500 = vrot.slane %v464, 5
    %v501 = vsel %vm469, %v500, %v499
    %502 = vrot.lane.b32.xlu0 %v501, 64
    %v503 = vpop.permute.xlu0 %502
    %v505 = vrot.slane %v462, 7
    %v506 = vrot.slane %v464, 6
    %v507 = vsel %vm469, %v506, %v505
    %508 = vrot.lane.b32.xlu0 %v507, 32
    %v509 = vpop.permute.xlu0 %508
    %v513 = vrot.slane %v465, 7
    %v514 = vsel %vm469, %v513, %v463
    %v516 = vrot.slane %v463, 1
    %v517 = vsel %vm469, %v465, %v516
    %518 = vrot.lane.b32.xlu0 %v517, 96
    %v519 = vpop.permute.xlu0 %518
    %v521 = vrot.slane %v463, 2
    %v522 = vrot.slane %v465, 1
    %v523 = vsel %vm469, %v522, %v521
    %524 = vrot.lane.b32.xlu0 %v523, 64
    %v525 = vpop.permute.xlu0 %524
    %v527 = vrot.slane %v463, 3
    %v528 = vrot.slane %v465, 2
    %v529 = vsel %vm469, %v528, %v527
    %530 = vrot.lane.b32.xlu0 %v529, 32
    %v531 = vpop.permute.xlu0 %530
    %v533 = vrot.slane %v463, 4
    %v534 = vrot.slane %v465, 3
    %v535 = vsel %vm469, %v534, %v533
    %v537 = vrot.slane %v463, 5
    %v538 = vrot.slane %v465, 4
    %v539 = vsel %vm469, %v538, %v537
    %540 = vrot.lane.b32.xlu0 %v539, 96
    %v541 = vpop.permute.xlu0 %540
    %v543 = vrot.slane %v463, 6
    %v544 = vrot.slane %v465, 5
    %v545 = vsel %vm469, %v544, %v543
    %546 = vrot.lane.b32.xlu0 %v545, 64
    %v547 = vpop.permute.xlu0 %546
    %v549 = vrot.slane %v463, 7
    %v550 = vrot.slane %v465, 6
    %v551 = vsel %vm469, %v550, %v549
    %552 = vrot.lane.b32.xlu0 %v551, 32
    %v553 = vpop.permute.xlu0 %552
    %v555 = vsel %vm263, %v470, %v475
    %v556 = vsel %vm95, %v475, %v481
    %v557 = vsel %vm207, %v481, %v487
    %v558 = vsel %vm263, %v491, %v497
    %v559 = vsel %vm95, %v497, %v503
    %v560 = vsel %vm207, %v503, %v509
    %v561 = vsel %vm263, %v514, %v519
    %v562 = vsel %vm95, %v519, %v525
    %v563 = vsel %vm207, %v525, %v531
    %v564 = vsel %vm263, %v535, %v541
    %v565 = vsel %vm95, %v541, %v547
    %v566 = vsel %vm207, %v547, %v553
    %v567 = vpack.c.bf16 %v555, %v555
    %v568 = vpack.c.bf16 %v556, %v556
    %v569 = vpack.c.bf16 %v557, %v557
    %v570 = vpack.c.bf16 %v558, %v558
    %v571 = vpack.c.bf16 %v559, %v559
    %v572 = vpack.c.bf16 %v560, %v560
    %v573 = vpack.c.bf16 %v561, %v561
    %v574 = vpack.c.bf16 %v562, %v562
    %v575 = vpack.c.bf16 %v563, %v563
    %v576 = vpack.c.bf16 %v564, %v564
    %v577 = vpack.c.bf16 %v565, %v565
    %v578 = vpack.c.bf16 %v566, %v566
    %v579 = vld [vmem:[%s6] sm:$0xff]
    %v580 = vld [vmem:[%s6 + $0x8] sm:$0xff]
    %v581 = vld [vmem:[%s6 + $0x10] sm:$0xff]
    %v582 = vld [vmem:[%s6 + $0x18] sm:$0xff]
    %v583 = vld [vmem:[%s6 + $0x20] sm:$0xff]
    %v584 = vld [vmem:[%s6 + $0x28] sm:$0xff]
    %v585 = vld [vmem:[%s6 + $0x30] sm:$0xff]
    %v586 = vld [vmem:[%s6 + $0x38] sm:$0xff]
    %v587 = vld [vmem:[%s6 + $0x40] sm:$0xff]
    %v588 = vld [vmem:[%s6 + $0x48] sm:$0xff]
    %v589 = vld [vmem:[%s6 + $0x50] sm:$0xff]
    %v590 = vld [vmem:[%s6 + $0x58] sm:$0xff]
    %v591 = vld [vmem:[%s6 + $0x60] sm:$0xff]
    %v592 = vld [vmem:[%s6 + $0x68] sm:$0xff]
    %v593 = vld [vmem:[%s6 + $0x70] sm:$0xff]
    %v594 = vld [vmem:[%s6 + $0x78] sm:$0xff]
    %v595 = vld [vmem:[%s6 + $0x80] sm:$0xff]
    %v596 = vld [vmem:[%s6 + $0x88] sm:$0xff]
    %v597 = vld [vmem:[%s6 + $0x90] sm:$0xff]
    %v598 = vld [vmem:[%s6 + $0x98] sm:$0xff]
    %v599 = vld [vmem:[%s6 + $0xa0] sm:$0xff]
    %v600 = vld [vmem:[%s6 + $0xa8] sm:$0xff]
    %v601 = vld [vmem:[%s6 + $0xb0] sm:$0xff]
    %v602 = vld [vmem:[%s6 + $0xb8] sm:$0xff]
    %v603 = vld [vmem:[%s6 + $0xc0] sm:$0xff]
    %v604 = vld [vmem:[%s6 + $0xc8] sm:$0xff]
    %v605 = vld [vmem:[%s6 + $0xd0] sm:$0xff]
    %v606 = vld [vmem:[%s6 + $0xd8] sm:$0xff]
    %v607 = vld [vmem:[%s6 + $0xe0] sm:$0xff]
    %v608 = vld [vmem:[%s6 + $0xe8] sm:$0xff]
    %v609 = vld [vmem:[%s6 + $0xf0] sm:$0xff]
    %v610 = vld [vmem:[%s6 + $0xf8] sm:$0xff]
    %v611 = vld [vmem:[%s6 + $0x100] sm:$0xff]
    %v612 = vld [vmem:[%s6 + $0x108] sm:$0xff]
    %v613 = vld [vmem:[%s6 + $0x110] sm:$0xff]
    %v614 = vld [vmem:[%s6 + $0x118] sm:$0xff]
    %v615 = vld [vmem:[%s6 + $0x120] sm:$0xff]
    %v616 = vld [vmem:[%s6 + $0x128] sm:$0xff]
    %v617 = vld [vmem:[%s6 + $0x130] sm:$0xff]
    %v618 = vld [vmem:[%s6 + $0x138] sm:$0xff]
    %v619 = vld [vmem:[%s6 + $0x140] sm:$0xff]
    %v620 = vld [vmem:[%s6 + $0x148] sm:$0xff]
    %v621 = vld [vmem:[%s6 + $0x150] sm:$0xff]
    %v622 = vld [vmem:[%s6 + $0x158] sm:$0xff]
    %v623 = vld [vmem:[%s6 + $0x160] sm:$0xff]
    %v624 = vld [vmem:[%s6 + $0x168] sm:$0xff]
    %v625 = vld [vmem:[%s6 + $0x170] sm:$0xff]
    %v626 = vld [vmem:[%s6 + $0x178] sm:$0xff]
    %v627 = vld [vmem:[%s6 + $0x180] sm:$0xff]
    %v628 = vld [vmem:[%s6 + $0x188] sm:$0xff]
    %v629 = vld [vmem:[%s6 + $0x190] sm:$0xff]
    %v630 = vld [vmem:[%s6 + $0x198] sm:$0xff]
    %v631 = vld [vmem:[%s6 + $0x1a0] sm:$0xff]
    %v632 = vld [vmem:[%s6 + $0x1a8] sm:$0xff]
    %v633 = vld [vmem:[%s6 + $0x1b0] sm:$0xff]
    %v634 = vld [vmem:[%s6 + $0x1b8] sm:$0xff]
    %v635 = vld [vmem:[%s6 + $0x1c0] sm:$0xff]
    %v636 = vld [vmem:[%s6 + $0x1c8] sm:$0xff]
    %v637 = vld [vmem:[%s6 + $0x1d0] sm:$0xff]
    %v638 = vld [vmem:[%s6 + $0x1d8] sm:$0xff]
    %v639 = vld [vmem:[%s6 + $0x1e0] sm:$0xff]
    %v640 = vld [vmem:[%s6 + $0x1e8] sm:$0xff]
    %v641 = vld [vmem:[%s6 + $0x1f0] sm:$0xff]
    %v642 = vld [vmem:[%s6 + $0x1f8] sm:$0xff]
    %v643 = vld [vmem:[%s6 + $0x200] sm:$0xff]
    %v644 = vld [vmem:[%s6 + $0x208] sm:$0xff]
    %v645 = vld [vmem:[%s6 + $0x210] sm:$0xff]
    %v646 = vld [vmem:[%s6 + $0x218] sm:$0xff]
    %v647 = vld [vmem:[%s6 + $0x220] sm:$0xff]
    %v648 = vld [vmem:[%s6 + $0x228] sm:$0xff]
    %v649 = vld [vmem:[%s6 + $0x230] sm:$0xff]
    %v650 = vld [vmem:[%s6 + $0x238] sm:$0xff]
    %v651 = vld [vmem:[%s6 + $0x240] sm:$0xff]
    %v652 = vld [vmem:[%s6 + $0x248] sm:$0xff]
    %v653 = vld [vmem:[%s6 + $0x250] sm:$0xff]
    %v654 = vld [vmem:[%s6 + $0x258] sm:$0xff]
    %v655 = vld [vmem:[%s6 + $0x260] sm:$0xff]
    %v656 = vld [vmem:[%s6 + $0x268] sm:$0xff]
    %v657 = vld [vmem:[%s6 + $0x270] sm:$0xff]
    %v658 = vld [vmem:[%s6 + $0x278] sm:$0xff]
    %v659 = vld [vmem:[%s6 + $0x280] sm:$0xff]
    %v660 = vld [vmem:[%s6 + $0x288] sm:$0xff]
    %v661 = vld [vmem:[%s6 + $0x290] sm:$0xff]
    %v662 = vld [vmem:[%s6 + $0x298] sm:$0xff]
    %v663 = vld [vmem:[%s6 + $0x2a0] sm:$0xff]
    %v664 = vld [vmem:[%s6 + $0x2a8] sm:$0xff]
    %v665 = vld [vmem:[%s6 + $0x2b0] sm:$0xff]
    %v666 = vld [vmem:[%s6 + $0x2b8] sm:$0xff]
    %v667 = vld [vmem:[%s6 + $0x2c0] sm:$0xff]
    %v668 = vld [vmem:[%s6 + $0x2c8] sm:$0xff]
    %v669 = vld [vmem:[%s6 + $0x2d0] sm:$0xff]
    %v670 = vld [vmem:[%s6 + $0x2d8] sm:$0xff]
    %v671 = vld [vmem:[%s6 + $0x2e0] sm:$0xff]
    %v672 = vld [vmem:[%s6 + $0x2e8] sm:$0xff]
    %v673 = vld [vmem:[%s6 + $0x2f0] sm:$0xff]
    %v674 = vld [vmem:[%s6 + $0x2f8] sm:$0xff]
    %v675 = vld [vmem:[%s6 + $0x300] sm:$0xff]
    %v676 = vld [vmem:[%s6 + $0x308] sm:$0xff]
    %v677 = vld [vmem:[%s6 + $0x310] sm:$0xff]
    %v678 = vld [vmem:[%s6 + $0x318] sm:$0xff]
    %v679 = vld [vmem:[%s6 + $0x320] sm:$0xff]
    %v680 = vld [vmem:[%s6 + $0x328] sm:$0xff]
    %v681 = vld [vmem:[%s6 + $0x330] sm:$0xff]
    %v682 = vld [vmem:[%s6 + $0x338] sm:$0xff]
    %v683 = vld [vmem:[%s6 + $0x340] sm:$0xff]
    %v684 = vld [vmem:[%s6 + $0x348] sm:$0xff]
    %v685 = vld [vmem:[%s6 + $0x350] sm:$0xff]
    %v686 = vld [vmem:[%s6 + $0x358] sm:$0xff]
    %v687 = vld [vmem:[%s6 + $0x360] sm:$0xff]
    %v688 = vld [vmem:[%s6 + $0x368] sm:$0xff]
    %v689 = vld [vmem:[%s6 + $0x370] sm:$0xff]
    %v690 = vld [vmem:[%s6 + $0x378] sm:$0xff]
    %v691 = vld [vmem:[%s6 + $0x380] sm:$0xff]
    %v692 = vld [vmem:[%s6 + $0x388] sm:$0xff]
    %v693 = vld [vmem:[%s6 + $0x390] sm:$0xff]
    %v694 = vld [vmem:[%s6 + $0x398] sm:$0xff]
    %v695 = vld [vmem:[%s6 + $0x3a0] sm:$0xff]
    %v696 = vld [vmem:[%s6 + $0x3a8] sm:$0xff]
    %v697 = vld [vmem:[%s6 + $0x3b0] sm:$0xff]
    %v698 = vld [vmem:[%s6 + $0x3b8] sm:$0xff]
    %v699 = vld [vmem:[%s6 + $0x3c0] sm:$0xff]
    %v700 = vld [vmem:[%s6 + $0x3c8] sm:$0xff]
    %v701 = vld [vmem:[%s6 + $0x3d0] sm:$0xff]
    %v702 = vld [vmem:[%s6 + $0x3d8] sm:$0xff]
    %v703 = vld [vmem:[%s6 + $0x3e0] sm:$0xff]
    %v704 = vld [vmem:[%s6 + $0x3e8] sm:$0xff]
    %v705 = vld [vmem:[%s6 + $0x3f0] sm:$0xff]
    %v706 = vld [vmem:[%s6 + $0x3f8] sm:$0xff]
    %v707 = vld [vmem:[%s6 + $0x400] sm:$0xff]
    %v708 = vld [vmem:[%s6 + $0x408] sm:$0xff]
    %v709 = vld [vmem:[%s6 + $0x410] sm:$0xff]
    %v710 = vld [vmem:[%s6 + $0x418] sm:$0xff]
    %v711 = vld [vmem:[%s6 + $0x420] sm:$0xff]
    %v712 = vld [vmem:[%s6 + $0x428] sm:$0xff]
    %v713 = vld [vmem:[%s6 + $0x430] sm:$0xff]
    %v714 = vld [vmem:[%s6 + $0x438] sm:$0xff]
    %v715 = vld [vmem:[%s6 + $0x440] sm:$0xff]
    %v716 = vld [vmem:[%s6 + $0x448] sm:$0xff]
    %v717 = vld [vmem:[%s6 + $0x450] sm:$0xff]
    %v718 = vld [vmem:[%s6 + $0x458] sm:$0xff]
    %v719 = vld [vmem:[%s6 + $0x460] sm:$0xff]
    %v720 = vld [vmem:[%s6 + $0x468] sm:$0xff]
    %v721 = vld [vmem:[%s6 + $0x470] sm:$0xff]
    %v722 = vld [vmem:[%s6 + $0x478] sm:$0xff]
    %v723 = vld [vmem:[%s6 + $0x480] sm:$0xff]
    %v724 = vld [vmem:[%s6 + $0x488] sm:$0xff]
    %v725 = vld [vmem:[%s6 + $0x490] sm:$0xff]
    %v726 = vld [vmem:[%s6 + $0x498] sm:$0xff]
    %v727 = vld [vmem:[%s6 + $0x4a0] sm:$0xff]
    %v728 = vld [vmem:[%s6 + $0x4a8] sm:$0xff]
    %v729 = vld [vmem:[%s6 + $0x4b0] sm:$0xff]
    %v730 = vld [vmem:[%s6 + $0x4b8] sm:$0xff]
    %v731 = vld [vmem:[%s6 + $0x4c0] sm:$0xff]
    %v732 = vld [vmem:[%s6 + $0x4c8] sm:$0xff]
    %v733 = vld [vmem:[%s6 + $0x4d0] sm:$0xff]
    %v734 = vld [vmem:[%s6 + $0x4d8] sm:$0xff]
    %v735 = vld [vmem:[%s6 + $0x4e0] sm:$0xff]
    %v736 = vld [vmem:[%s6 + $0x4e8] sm:$0xff]
    %v737 = vld [vmem:[%s6 + $0x4f0] sm:$0xff]
    %v738 = vld [vmem:[%s6 + $0x4f8] sm:$0xff]
    %v739 = vld [vmem:[%s6 + $0x500] sm:$0xff]
    %v740 = vld [vmem:[%s6 + $0x508] sm:$0xff]
    %v741 = vld [vmem:[%s6 + $0x510] sm:$0xff]
    %v742 = vld [vmem:[%s6 + $0x518] sm:$0xff]
    %v743 = vld [vmem:[%s6 + $0x520] sm:$0xff]
    %v744 = vld [vmem:[%s6 + $0x528] sm:$0xff]
    %v745 = vld [vmem:[%s6 + $0x530] sm:$0xff]
    %v746 = vld [vmem:[%s6 + $0x538] sm:$0xff]
    %v747 = vld [vmem:[%s6 + $0x540] sm:$0xff]
    %v748 = vld [vmem:[%s6 + $0x548] sm:$0xff]
    %v749 = vld [vmem:[%s6 + $0x550] sm:$0xff]
    %v750 = vld [vmem:[%s6 + $0x558] sm:$0xff]
    %v751 = vld [vmem:[%s6 + $0x560] sm:$0xff]
    %v752 = vld [vmem:[%s6 + $0x568] sm:$0xff]
    %v753 = vld [vmem:[%s6 + $0x570] sm:$0xff]
    %v754 = vld [vmem:[%s6 + $0x578] sm:$0xff]
    %v755 = vld [vmem:[%s6 + $0x580] sm:$0xff]
    %v756 = vld [vmem:[%s6 + $0x588] sm:$0xff]
    %v757 = vld [vmem:[%s6 + $0x590] sm:$0xff]
    %v758 = vld [vmem:[%s6 + $0x598] sm:$0xff]
    %v759 = vld [vmem:[%s6 + $0x5a0] sm:$0xff]
    %v760 = vld [vmem:[%s6 + $0x5a8] sm:$0xff]
    %v761 = vld [vmem:[%s6 + $0x5b0] sm:$0xff]
    %v762 = vld [vmem:[%s6 + $0x5b8] sm:$0xff]
    %v763 = vld [vmem:[%s6 + $0x5c0] sm:$0xff]
    %v764 = vld [vmem:[%s6 + $0x5c8] sm:$0xff]
    %v765 = vld [vmem:[%s6 + $0x5d0] sm:$0xff]
    %v766 = vld [vmem:[%s6 + $0x5d8] sm:$0xff]
    %v767 = vld [vmem:[%s6 + $0x5e0] sm:$0xff]
    %v768 = vld [vmem:[%s6 + $0x5e8] sm:$0xff]
    %v769 = vld [vmem:[%s6 + $0x5f0] sm:$0xff]
    %v770 = vld [vmem:[%s6 + $0x5f8] sm:$0xff]
    %v771 = vld [vmem:[%s7] sm:$0x3]
    %v773 = vlaneseq
    %v774 = vshrl.u32 %v773, 7
    %v775 = vsub.s32 0, %v774
    %v776 = vrot.slane %v771, %v775
    %v777 = vlaneseq
    %v778 = vshrl.u32 %v777, 7
    %v779 = vsub.s32 1, %v778
    %v780 = vrot.slane %v771, %v779
    %v975 = vunpack.c.l.b16 %v579
    %v976 = vunpack.c.h.b16 %v579
    %v977 = vunpack.c.l.b16 %v580
    %v978 = vunpack.c.h.b16 %v580
    %v979 = vunpack.c.l.b16 %v581
    %v980 = vunpack.c.h.b16 %v581
    %v981 = vunpack.c.l.b16 %v582
    %v982 = vunpack.c.h.b16 %v582
    %v983 = vunpack.c.l.b16 %v583
    %v984 = vunpack.c.h.b16 %v583
    %v985 = vunpack.c.l.b16 %v584
    %v986 = vunpack.c.h.b16 %v584
    %v987 = vunpack.c.l.b16 %v585
    %v988 = vunpack.c.h.b16 %v585
    %v989 = vunpack.c.l.b16 %v586
    %v990 = vunpack.c.h.b16 %v586
    %v991 = vunpack.c.l.b16 %v587
    %v992 = vunpack.c.h.b16 %v587
    %v993 = vunpack.c.l.b16 %v588
    %v994 = vunpack.c.h.b16 %v588
    %v995 = vunpack.c.l.b16 %v589
    %v996 = vunpack.c.h.b16 %v589
    %v997 = vunpack.c.l.b16 %v590
    %v998 = vunpack.c.h.b16 %v590
    %v999 = vunpack.c.l.b16 %v591
    %v1000 = vunpack.c.h.b16 %v591
    %v1001 = vunpack.c.l.b16 %v592
    %v1002 = vunpack.c.h.b16 %v592
    %v1003 = vunpack.c.l.b16 %v593
    %v1004 = vunpack.c.h.b16 %v593
    %v1005 = vunpack.c.l.b16 %v594
    %v1006 = vunpack.c.h.b16 %v594
    %v1007 = vunpack.c.l.b16 %v595
    %v1008 = vunpack.c.h.b16 %v595
    %v1009 = vunpack.c.l.b16 %v596
    %v1010 = vunpack.c.h.b16 %v596
    %v1011 = vunpack.c.l.b16 %v597
    %v1012 = vunpack.c.h.b16 %v597
    %v1013 = vunpack.c.l.b16 %v598
    %v1014 = vunpack.c.h.b16 %v598
    %v1015 = vunpack.c.l.b16 %v599
    %v1016 = vunpack.c.h.b16 %v599
    %v1017 = vunpack.c.l.b16 %v600
    %v1018 = vunpack.c.h.b16 %v600
    %v1019 = vunpack.c.l.b16 %v601
    %v1020 = vunpack.c.h.b16 %v601
    %v1021 = vunpack.c.l.b16 %v602
    %v1022 = vunpack.c.h.b16 %v602
    %v1023 = vunpack.c.l.b16 %v603
    %v1024 = vunpack.c.h.b16 %v603
    %v1025 = vunpack.c.l.b16 %v604
    %v1026 = vunpack.c.h.b16 %v604
    %v1027 = vunpack.c.l.b16 %v605
    %v1028 = vunpack.c.h.b16 %v605
    %v1029 = vunpack.c.l.b16 %v606
    %v1030 = vunpack.c.h.b16 %v606
    %v1031 = vunpack.c.l.b16 %v607
    %v1032 = vunpack.c.h.b16 %v607
    %v1033 = vunpack.c.l.b16 %v608
    %v1034 = vunpack.c.h.b16 %v608
    %v1035 = vunpack.c.l.b16 %v609
    %v1036 = vunpack.c.h.b16 %v609
    %v1037 = vunpack.c.l.b16 %v610
    %v1038 = vunpack.c.h.b16 %v610
    %v1039 = vunpack.c.l.b16 %v611
    %v1040 = vunpack.c.h.b16 %v611
    %v1041 = vunpack.c.l.b16 %v612
    %v1042 = vunpack.c.h.b16 %v612
    %v1043 = vunpack.c.l.b16 %v613
    %v1044 = vunpack.c.h.b16 %v613
    %v1045 = vunpack.c.l.b16 %v614
    %v1046 = vunpack.c.h.b16 %v614
    %v1047 = vunpack.c.l.b16 %v615
    %v1048 = vunpack.c.h.b16 %v615
    %v1049 = vunpack.c.l.b16 %v616
    %v1050 = vunpack.c.h.b16 %v616
    %v1051 = vunpack.c.l.b16 %v617
    %v1052 = vunpack.c.h.b16 %v617
    %v1053 = vunpack.c.l.b16 %v618
    %v1054 = vunpack.c.h.b16 %v618
    %v1055 = vunpack.c.l.b16 %v619
    %v1056 = vunpack.c.h.b16 %v619
    %v1057 = vunpack.c.l.b16 %v620
    %v1058 = vunpack.c.h.b16 %v620
    %v1059 = vunpack.c.l.b16 %v621
    %v1060 = vunpack.c.h.b16 %v621
    %v1061 = vunpack.c.l.b16 %v622
    %v1062 = vunpack.c.h.b16 %v622
    %v1063 = vunpack.c.l.b16 %v623
    %v1064 = vunpack.c.h.b16 %v623
    %v1065 = vunpack.c.l.b16 %v624
    %v1066 = vunpack.c.h.b16 %v624
    %v1067 = vunpack.c.l.b16 %v625
    %v1068 = vunpack.c.h.b16 %v625
    %v1069 = vunpack.c.l.b16 %v626
    %v1070 = vunpack.c.h.b16 %v626
    %v1071 = vunpack.c.l.b16 %v627
    %v1072 = vunpack.c.h.b16 %v627
    %v1073 = vunpack.c.l.b16 %v628
    %v1074 = vunpack.c.h.b16 %v628
    %v1075 = vunpack.c.l.b16 %v629
    %v1076 = vunpack.c.h.b16 %v629
    %v1077 = vunpack.c.l.b16 %v630
    %v1078 = vunpack.c.h.b16 %v630
    %v1079 = vunpack.c.l.b16 %v631
    %v1080 = vunpack.c.h.b16 %v631
    %v1081 = vunpack.c.l.b16 %v632
    %v1082 = vunpack.c.h.b16 %v632
    %v1083 = vunpack.c.l.b16 %v633
    %v1084 = vunpack.c.h.b16 %v633
    %v1085 = vunpack.c.l.b16 %v634
    %v1086 = vunpack.c.h.b16 %v634
    %v1087 = vunpack.c.l.b16 %v635
    %v1088 = vunpack.c.h.b16 %v635
    %v1089 = vunpack.c.l.b16 %v636
    %v1090 = vunpack.c.h.b16 %v636
    %v1091 = vunpack.c.l.b16 %v637
    %v1092 = vunpack.c.h.b16 %v637
    %v1093 = vunpack.c.l.b16 %v638
    %v1094 = vunpack.c.h.b16 %v638
    %v1095 = vunpack.c.l.b16 %v639
    %v1096 = vunpack.c.h.b16 %v639
    %v1097 = vunpack.c.l.b16 %v640
    %v1098 = vunpack.c.h.b16 %v640
    %v1099 = vunpack.c.l.b16 %v641
    %v1100 = vunpack.c.h.b16 %v641
    %v1101 = vunpack.c.l.b16 %v642
    %v1102 = vunpack.c.h.b16 %v642
    %v1103 = vunpack.c.l.b16 %v643
    %v1104 = vunpack.c.h.b16 %v643
    %v1105 = vunpack.c.l.b16 %v644
    %v1106 = vunpack.c.h.b16 %v644
    %v1107 = vunpack.c.l.b16 %v645
    %v1108 = vunpack.c.h.b16 %v645
    %v1109 = vunpack.c.l.b16 %v646
    %v1110 = vunpack.c.h.b16 %v646
    %v1111 = vunpack.c.l.b16 %v647
    %v1112 = vunpack.c.h.b16 %v647
    %v1113 = vunpack.c.l.b16 %v648
    %v1114 = vunpack.c.h.b16 %v648
    %v1115 = vunpack.c.l.b16 %v649
    %v1116 = vunpack.c.h.b16 %v649
    %v1117 = vunpack.c.l.b16 %v650
    %v1118 = vunpack.c.h.b16 %v650
    %v1119 = vunpack.c.l.b16 %v651
    %v1120 = vunpack.c.h.b16 %v651
    %v1121 = vunpack.c.l.b16 %v652
    %v1122 = vunpack.c.h.b16 %v652
    %v1123 = vunpack.c.l.b16 %v653
    %v1124 = vunpack.c.h.b16 %v653
    %v1125 = vunpack.c.l.b16 %v654
    %v1126 = vunpack.c.h.b16 %v654
    %v1127 = vunpack.c.l.b16 %v655
    %v1128 = vunpack.c.h.b16 %v655
    %v1129 = vunpack.c.l.b16 %v656
    %v1130 = vunpack.c.h.b16 %v656
    %v1131 = vunpack.c.l.b16 %v657
    %v1132 = vunpack.c.h.b16 %v657
    %v1133 = vunpack.c.l.b16 %v658
    %v1134 = vunpack.c.h.b16 %v658
    %v1135 = vunpack.c.l.b16 %v659
    %v1136 = vunpack.c.h.b16 %v659
    %v1137 = vunpack.c.l.b16 %v660
    %v1138 = vunpack.c.h.b16 %v660
    %v1139 = vunpack.c.l.b16 %v661
    %v1140 = vunpack.c.h.b16 %v661
    %v1141 = vunpack.c.l.b16 %v662
    %v1142 = vunpack.c.h.b16 %v662
    %v1143 = vunpack.c.l.b16 %v663
    %v1144 = vunpack.c.h.b16 %v663
    %v1145 = vunpack.c.l.b16 %v664
    %v1146 = vunpack.c.h.b16 %v664
    %v1147 = vunpack.c.l.b16 %v665
    %v1148 = vunpack.c.h.b16 %v665
    %v1149 = vunpack.c.l.b16 %v666
    %v1150 = vunpack.c.h.b16 %v666
    %v1151 = vunpack.c.l.b16 %v667
    %v1152 = vunpack.c.h.b16 %v667
    %v1153 = vunpack.c.l.b16 %v668
    %v1154 = vunpack.c.h.b16 %v668
    %v1155 = vunpack.c.l.b16 %v669
    %v1156 = vunpack.c.h.b16 %v669
    %v1157 = vunpack.c.l.b16 %v670
    %v1158 = vunpack.c.h.b16 %v670
    %v1159 = vunpack.c.l.b16 %v671
    %v1160 = vunpack.c.h.b16 %v671
    %v1161 = vunpack.c.l.b16 %v672
    %v1162 = vunpack.c.h.b16 %v672
    %v1163 = vunpack.c.l.b16 %v673
    %v1164 = vunpack.c.h.b16 %v673
    %v1165 = vunpack.c.l.b16 %v674
    %v1166 = vunpack.c.h.b16 %v674
    %v1167 = vunpack.c.l.b16 %v675
    %v1168 = vunpack.c.h.b16 %v675
    %v1169 = vunpack.c.l.b16 %v676
    %v1170 = vunpack.c.h.b16 %v676
    %v1171 = vunpack.c.l.b16 %v677
    %v1172 = vunpack.c.h.b16 %v677
    %v1173 = vunpack.c.l.b16 %v678
    %v1174 = vunpack.c.h.b16 %v678
    %v1175 = vunpack.c.l.b16 %v679
    %v1176 = vunpack.c.h.b16 %v679
    %v1177 = vunpack.c.l.b16 %v680
    %v1178 = vunpack.c.h.b16 %v680
    %v1179 = vunpack.c.l.b16 %v681
    %v1180 = vunpack.c.h.b16 %v681
    %v1181 = vunpack.c.l.b16 %v682
    %v1182 = vunpack.c.h.b16 %v682
    %v1183 = vunpack.c.l.b16 %v683
    %v1184 = vunpack.c.h.b16 %v683
    %v1185 = vunpack.c.l.b16 %v684
    %v1186 = vunpack.c.h.b16 %v684
    %v1187 = vunpack.c.l.b16 %v685
    %v1188 = vunpack.c.h.b16 %v685
    %v1189 = vunpack.c.l.b16 %v686
    %v1190 = vunpack.c.h.b16 %v686
    %v1191 = vunpack.c.l.b16 %v687
    %v1192 = vunpack.c.h.b16 %v687
    %v1193 = vunpack.c.l.b16 %v688
    %v1194 = vunpack.c.h.b16 %v688
    %v1195 = vunpack.c.l.b16 %v689
    %v1196 = vunpack.c.h.b16 %v689
    %v1197 = vunpack.c.l.b16 %v690
    %v1198 = vunpack.c.h.b16 %v690
    %v1199 = vunpack.c.l.b16 %v691
    %v1200 = vunpack.c.h.b16 %v691
    %v1201 = vunpack.c.l.b16 %v692
    %v1202 = vunpack.c.h.b16 %v692
    %v1203 = vunpack.c.l.b16 %v693
    %v1204 = vunpack.c.h.b16 %v693
    %v1205 = vunpack.c.l.b16 %v694
    %v1206 = vunpack.c.h.b16 %v694
    %v1207 = vunpack.c.l.b16 %v695
    %v1208 = vunpack.c.h.b16 %v695
    %v1209 = vunpack.c.l.b16 %v696
    %v1210 = vunpack.c.h.b16 %v696
    %v1211 = vunpack.c.l.b16 %v697
    %v1212 = vunpack.c.h.b16 %v697
    %v1213 = vunpack.c.l.b16 %v698
    %v1214 = vunpack.c.h.b16 %v698
    %v1215 = vunpack.c.l.b16 %v699
    %v1216 = vunpack.c.h.b16 %v699
    %v1217 = vunpack.c.l.b16 %v700
    %v1218 = vunpack.c.h.b16 %v700
    %v1219 = vunpack.c.l.b16 %v701
    %v1220 = vunpack.c.h.b16 %v701
    %v1221 = vunpack.c.l.b16 %v702
    %v1222 = vunpack.c.h.b16 %v702
    %v1223 = vunpack.c.l.b16 %v703
    %v1224 = vunpack.c.h.b16 %v703
    %v1225 = vunpack.c.l.b16 %v704
    %v1226 = vunpack.c.h.b16 %v704
    %v1227 = vunpack.c.l.b16 %v705
    %v1228 = vunpack.c.h.b16 %v705
    %v1229 = vunpack.c.l.b16 %v706
    %v1230 = vunpack.c.h.b16 %v706
    %v1231 = vunpack.c.l.b16 %v707
    %v1232 = vunpack.c.h.b16 %v707
    %v1233 = vunpack.c.l.b16 %v708
    %v1234 = vunpack.c.h.b16 %v708
    %v1235 = vunpack.c.l.b16 %v709
    %v1236 = vunpack.c.h.b16 %v709
    %v1237 = vunpack.c.l.b16 %v710
    %v1238 = vunpack.c.h.b16 %v710
    %v1239 = vunpack.c.l.b16 %v711
    %v1240 = vunpack.c.h.b16 %v711
    %v1241 = vunpack.c.l.b16 %v712
    %v1242 = vunpack.c.h.b16 %v712
    %v1243 = vunpack.c.l.b16 %v713
    %v1244 = vunpack.c.h.b16 %v713
    %v1245 = vunpack.c.l.b16 %v714
    %v1246 = vunpack.c.h.b16 %v714
    %v1247 = vunpack.c.l.b16 %v715
    %v1248 = vunpack.c.h.b16 %v715
    %v1249 = vunpack.c.l.b16 %v716
    %v1250 = vunpack.c.h.b16 %v716
    %v1251 = vunpack.c.l.b16 %v717
    %v1252 = vunpack.c.h.b16 %v717
    %v1253 = vunpack.c.l.b16 %v718
    %v1254 = vunpack.c.h.b16 %v718
    %v1255 = vunpack.c.l.b16 %v719
    %v1256 = vunpack.c.h.b16 %v719
    %v1257 = vunpack.c.l.b16 %v720
    %v1258 = vunpack.c.h.b16 %v720
    %v1259 = vunpack.c.l.b16 %v721
    %v1260 = vunpack.c.h.b16 %v721
    %v1261 = vunpack.c.l.b16 %v722
    %v1262 = vunpack.c.h.b16 %v722
    %v1263 = vunpack.c.l.b16 %v723
    %v1264 = vunpack.c.h.b16 %v723
    %v1265 = vunpack.c.l.b16 %v724
    %v1266 = vunpack.c.h.b16 %v724
    %v1267 = vunpack.c.l.b16 %v725
    %v1268 = vunpack.c.h.b16 %v725
    %v1269 = vunpack.c.l.b16 %v726
    %v1270 = vunpack.c.h.b16 %v726
    %v1271 = vunpack.c.l.b16 %v727
    %v1272 = vunpack.c.h.b16 %v727
    %v1273 = vunpack.c.l.b16 %v728
    %v1274 = vunpack.c.h.b16 %v728
    %v1275 = vunpack.c.l.b16 %v729
    %v1276 = vunpack.c.h.b16 %v729
    %v1277 = vunpack.c.l.b16 %v730
    %v1278 = vunpack.c.h.b16 %v730
    %v1279 = vunpack.c.l.b16 %v731
    %v1280 = vunpack.c.h.b16 %v731
    %v1281 = vunpack.c.l.b16 %v732
    %v1282 = vunpack.c.h.b16 %v732
    %v1283 = vunpack.c.l.b16 %v733
    %v1284 = vunpack.c.h.b16 %v733
    %v1285 = vunpack.c.l.b16 %v734
    %v1286 = vunpack.c.h.b16 %v734
    %v1287 = vunpack.c.l.b16 %v735
    %v1288 = vunpack.c.h.b16 %v735
    %v1289 = vunpack.c.l.b16 %v736
    %v1290 = vunpack.c.h.b16 %v736
    %v1291 = vunpack.c.l.b16 %v737
    %v1292 = vunpack.c.h.b16 %v737
    %v1293 = vunpack.c.l.b16 %v738
    %v1294 = vunpack.c.h.b16 %v738
    %v1295 = vunpack.c.l.b16 %v739
    %v1296 = vunpack.c.h.b16 %v739
    %v1297 = vunpack.c.l.b16 %v740
    %v1298 = vunpack.c.h.b16 %v740
    %v1299 = vunpack.c.l.b16 %v741
    %v1300 = vunpack.c.h.b16 %v741
    %v1301 = vunpack.c.l.b16 %v742
    %v1302 = vunpack.c.h.b16 %v742
    %v1303 = vunpack.c.l.b16 %v743
    %v1304 = vunpack.c.h.b16 %v743
    %v1305 = vunpack.c.l.b16 %v744
    %v1306 = vunpack.c.h.b16 %v744
    %v1307 = vunpack.c.l.b16 %v745
    %v1308 = vunpack.c.h.b16 %v745
    %v1309 = vunpack.c.l.b16 %v746
    %v1310 = vunpack.c.h.b16 %v746
    %v1311 = vunpack.c.l.b16 %v747
    %v1312 = vunpack.c.h.b16 %v747
    %v1313 = vunpack.c.l.b16 %v748
    %v1314 = vunpack.c.h.b16 %v748
    %v1315 = vunpack.c.l.b16 %v749
    %v1316 = vunpack.c.h.b16 %v749
    %v1317 = vunpack.c.l.b16 %v750
    %v1318 = vunpack.c.h.b16 %v750
    %v1319 = vunpack.c.l.b16 %v751
    %v1320 = vunpack.c.h.b16 %v751
    %v1321 = vunpack.c.l.b16 %v752
    %v1322 = vunpack.c.h.b16 %v752
    %v1323 = vunpack.c.l.b16 %v753
    %v1324 = vunpack.c.h.b16 %v753
    %v1325 = vunpack.c.l.b16 %v754
    %v1326 = vunpack.c.h.b16 %v754
    %v1327 = vunpack.c.l.b16 %v755
    %v1328 = vunpack.c.h.b16 %v755
    %v1329 = vunpack.c.l.b16 %v756
    %v1330 = vunpack.c.h.b16 %v756
    %v1331 = vunpack.c.l.b16 %v757
    %v1332 = vunpack.c.h.b16 %v757
    %v1333 = vunpack.c.l.b16 %v758
    %v1334 = vunpack.c.h.b16 %v758
    %v1335 = vunpack.c.l.b16 %v759
    %v1336 = vunpack.c.h.b16 %v759
    %v1337 = vunpack.c.l.b16 %v760
    %v1338 = vunpack.c.h.b16 %v760
    %v1339 = vunpack.c.l.b16 %v761
    %v1340 = vunpack.c.h.b16 %v761
    %v1341 = vunpack.c.l.b16 %v762
    %v1342 = vunpack.c.h.b16 %v762
    %v1343 = vunpack.c.l.b16 %v763
    %v1344 = vunpack.c.h.b16 %v763
    %v1345 = vunpack.c.l.b16 %v764
    %v1346 = vunpack.c.h.b16 %v764
    %v1347 = vunpack.c.l.b16 %v765
    %v1348 = vunpack.c.h.b16 %v765
    %v1349 = vunpack.c.l.b16 %v766
    %v1350 = vunpack.c.h.b16 %v766
    %v1351 = vunpack.c.l.b16 %v767
    %v1352 = vunpack.c.h.b16 %v767
    %v1353 = vunpack.c.l.b16 %v768
    %v1354 = vunpack.c.h.b16 %v768
    %v1355 = vunpack.c.l.b16 %v769
    %v1356 = vunpack.c.h.b16 %v769
    %v1357 = vunpack.c.l.b16 %v770
    %v1358 = vunpack.c.h.b16 %v770
    %v1359 = vpack.c.b16 %v987, %v975
    %v1360 = vpack.c.b16 %v988, %v976
    %v1361 = vpack.c.b16 %v989, %v977
    %v1362 = vpack.c.b16 %v990, %v978
    %v1363 = vpack.c.b16 %v991, %v979
    %v1364 = vpack.c.b16 %v992, %v980
    %v1365 = vpack.c.b16 %v993, %v981
    %v1366 = vpack.c.b16 %v994, %v982
    %v1367 = vpack.c.b16 %v995, %v983
    %v1368 = vpack.c.b16 %v996, %v984
    %v1369 = vpack.c.b16 %v997, %v985
    %v1370 = vpack.c.b16 %v998, %v986
    %v1371 = vpack.c.b16 %v1011, %v999
    %v1372 = vpack.c.b16 %v1012, %v1000
    %v1373 = vpack.c.b16 %v1013, %v1001
    %v1374 = vpack.c.b16 %v1014, %v1002
    %v1375 = vpack.c.b16 %v1015, %v1003
    %v1376 = vpack.c.b16 %v1016, %v1004
    %v1377 = vpack.c.b16 %v1017, %v1005
    %v1378 = vpack.c.b16 %v1018, %v1006
    %v1379 = vpack.c.b16 %v1019, %v1007
    %v1380 = vpack.c.b16 %v1020, %v1008
    %v1381 = vpack.c.b16 %v1021, %v1009
    %v1382 = vpack.c.b16 %v1022, %v1010
    %v1383 = vpack.c.b16 %v1035, %v1023
    %v1384 = vpack.c.b16 %v1036, %v1024
    %v1385 = vpack.c.b16 %v1037, %v1025
    %v1386 = vpack.c.b16 %v1038, %v1026
    %v1387 = vpack.c.b16 %v1039, %v1027
    %v1388 = vpack.c.b16 %v1040, %v1028
    %v1389 = vpack.c.b16 %v1041, %v1029
    %v1390 = vpack.c.b16 %v1042, %v1030
    %v1391 = vpack.c.b16 %v1043, %v1031
    %v1392 = vpack.c.b16 %v1044, %v1032
    %v1393 = vpack.c.b16 %v1045, %v1033
    %v1394 = vpack.c.b16 %v1046, %v1034
    %v1395 = vpack.c.b16 %v1059, %v1047
    %v1396 = vpack.c.b16 %v1060, %v1048
    %v1397 = vpack.c.b16 %v1061, %v1049
    %v1398 = vpack.c.b16 %v1062, %v1050
    %v1399 = vpack.c.b16 %v1063, %v1051
    %v1400 = vpack.c.b16 %v1064, %v1052
    %v1401 = vpack.c.b16 %v1065, %v1053
    %v1402 = vpack.c.b16 %v1066, %v1054
    %v1403 = vpack.c.b16 %v1067, %v1055
    %v1404 = vpack.c.b16 %v1068, %v1056
    %v1405 = vpack.c.b16 %v1069, %v1057
    %v1406 = vpack.c.b16 %v1070, %v1058
    %v1407 = vpack.c.b16 %v1083, %v1071
    %v1408 = vpack.c.b16 %v1084, %v1072
    %v1409 = vpack.c.b16 %v1085, %v1073
    %v1410 = vpack.c.b16 %v1086, %v1074
    %v1411 = vpack.c.b16 %v1087, %v1075
    %v1412 = vpack.c.b16 %v1088, %v1076
    %v1413 = vpack.c.b16 %v1089, %v1077
    %v1414 = vpack.c.b16 %v1090, %v1078
    %v1415 = vpack.c.b16 %v1091, %v1079
    %v1416 = vpack.c.b16 %v1092, %v1080
    %v1417 = vpack.c.b16 %v1093, %v1081
    %v1418 = vpack.c.b16 %v1094, %v1082
    %v1419 = vpack.c.b16 %v1107, %v1095
    %v1420 = vpack.c.b16 %v1108, %v1096
    %v1421 = vpack.c.b16 %v1109, %v1097
    %v1422 = vpack.c.b16 %v1110, %v1098
    %v1423 = vpack.c.b16 %v1111, %v1099
    %v1424 = vpack.c.b16 %v1112, %v1100
    %v1425 = vpack.c.b16 %v1113, %v1101
    %v1426 = vpack.c.b16 %v1114, %v1102
    %v1427 = vpack.c.b16 %v1115, %v1103
    %v1428 = vpack.c.b16 %v1116, %v1104
    %v1429 = vpack.c.b16 %v1117, %v1105
    %v1430 = vpack.c.b16 %v1118, %v1106
    %v1431 = vpack.c.b16 %v1131, %v1119
    %v1432 = vpack.c.b16 %v1132, %v1120
    %v1433 = vpack.c.b16 %v1133, %v1121
    %v1434 = vpack.c.b16 %v1134, %v1122
    %v1435 = vpack.c.b16 %v1135, %v1123
    %v1436 = vpack.c.b16 %v1136, %v1124
    %v1437 = vpack.c.b16 %v1137, %v1125
    %v1438 = vpack.c.b16 %v1138, %v1126
    %v1439 = vpack.c.b16 %v1139, %v1127
    %v1440 = vpack.c.b16 %v1140, %v1128
    %v1441 = vpack.c.b16 %v1141, %v1129
    %v1442 = vpack.c.b16 %v1142, %v1130
    %v1443 = vpack.c.b16 %v1155, %v1143
    %v1444 = vpack.c.b16 %v1156, %v1144
    %v1445 = vpack.c.b16 %v1157, %v1145
    %v1446 = vpack.c.b16 %v1158, %v1146
    %v1447 = vpack.c.b16 %v1159, %v1147
    %v1448 = vpack.c.b16 %v1160, %v1148
    %v1449 = vpack.c.b16 %v1161, %v1149
    %v1450 = vpack.c.b16 %v1162, %v1150
    %v1451 = vpack.c.b16 %v1163, %v1151
    %v1452 = vpack.c.b16 %v1164, %v1152
    %v1453 = vpack.c.b16 %v1165, %v1153
    %v1454 = vpack.c.b16 %v1166, %v1154
    %v1455 = vpack.c.b16 %v1179, %v1167
    %v1456 = vpack.c.b16 %v1180, %v1168
    %v1457 = vpack.c.b16 %v1181, %v1169
    %v1458 = vpack.c.b16 %v1182, %v1170
    %v1459 = vpack.c.b16 %v1183, %v1171
    %v1460 = vpack.c.b16 %v1184, %v1172
    %v1461 = vpack.c.b16 %v1185, %v1173
    %v1462 = vpack.c.b16 %v1186, %v1174
    %v1463 = vpack.c.b16 %v1187, %v1175
    %v1464 = vpack.c.b16 %v1188, %v1176
    %v1465 = vpack.c.b16 %v1189, %v1177
    %v1466 = vpack.c.b16 %v1190, %v1178
    %v1467 = vpack.c.b16 %v1203, %v1191
    %v1468 = vpack.c.b16 %v1204, %v1192
    %v1469 = vpack.c.b16 %v1205, %v1193
    %v1470 = vpack.c.b16 %v1206, %v1194
    %v1471 = vpack.c.b16 %v1207, %v1195
    %v1472 = vpack.c.b16 %v1208, %v1196
    %v1473 = vpack.c.b16 %v1209, %v1197
    %v1474 = vpack.c.b16 %v1210, %v1198
    %v1475 = vpack.c.b16 %v1211, %v1199
    %v1476 = vpack.c.b16 %v1212, %v1200
    %v1477 = vpack.c.b16 %v1213, %v1201
    %v1478 = vpack.c.b16 %v1214, %v1202
    %v1479 = vpack.c.b16 %v1227, %v1215
    %v1480 = vpack.c.b16 %v1228, %v1216
    %v1481 = vpack.c.b16 %v1229, %v1217
    %v1482 = vpack.c.b16 %v1230, %v1218
    %v1483 = vpack.c.b16 %v1231, %v1219
    %v1484 = vpack.c.b16 %v1232, %v1220
    %v1485 = vpack.c.b16 %v1233, %v1221
    %v1486 = vpack.c.b16 %v1234, %v1222
    %v1487 = vpack.c.b16 %v1235, %v1223
    %v1488 = vpack.c.b16 %v1236, %v1224
    %v1489 = vpack.c.b16 %v1237, %v1225
    %v1490 = vpack.c.b16 %v1238, %v1226
    %v1491 = vpack.c.b16 %v1251, %v1239
    %v1492 = vpack.c.b16 %v1252, %v1240
    %v1493 = vpack.c.b16 %v1253, %v1241
    %v1494 = vpack.c.b16 %v1254, %v1242
    %v1495 = vpack.c.b16 %v1255, %v1243
    %v1496 = vpack.c.b16 %v1256, %v1244
    %v1497 = vpack.c.b16 %v1257, %v1245
    %v1498 = vpack.c.b16 %v1258, %v1246
    %v1499 = vpack.c.b16 %v1259, %v1247
    %v1500 = vpack.c.b16 %v1260, %v1248
    %v1501 = vpack.c.b16 %v1261, %v1249
    %v1502 = vpack.c.b16 %v1262, %v1250
    %v1503 = vpack.c.b16 %v1275, %v1263
    %v1504 = vpack.c.b16 %v1276, %v1264
    %v1505 = vpack.c.b16 %v1277, %v1265
    %v1506 = vpack.c.b16 %v1278, %v1266
    %v1507 = vpack.c.b16 %v1279, %v1267
    %v1508 = vpack.c.b16 %v1280, %v1268
    %v1509 = vpack.c.b16 %v1281, %v1269
    %v1510 = vpack.c.b16 %v1282, %v1270
    %v1511 = vpack.c.b16 %v1283, %v1271
    %v1512 = vpack.c.b16 %v1284, %v1272
    %v1513 = vpack.c.b16 %v1285, %v1273
    %v1514 = vpack.c.b16 %v1286, %v1274
    %v1515 = vpack.c.b16 %v1299, %v1287
    %v1516 = vpack.c.b16 %v1300, %v1288
    %v1517 = vpack.c.b16 %v1301, %v1289
    %v1518 = vpack.c.b16 %v1302, %v1290
    %v1519 = vpack.c.b16 %v1303, %v1291
    %v1520 = vpack.c.b16 %v1304, %v1292
    %v1521 = vpack.c.b16 %v1305, %v1293
    %v1522 = vpack.c.b16 %v1306, %v1294
    %v1523 = vpack.c.b16 %v1307, %v1295
    %v1524 = vpack.c.b16 %v1308, %v1296
    %v1525 = vpack.c.b16 %v1309, %v1297
    %v1526 = vpack.c.b16 %v1310, %v1298
    %v1527 = vpack.c.b16 %v1323, %v1311
    %v1528 = vpack.c.b16 %v1324, %v1312
    %v1529 = vpack.c.b16 %v1325, %v1313
    %v1530 = vpack.c.b16 %v1326, %v1314
    %v1531 = vpack.c.b16 %v1327, %v1315
    %v1532 = vpack.c.b16 %v1328, %v1316
    %v1533 = vpack.c.b16 %v1329, %v1317
    %v1534 = vpack.c.b16 %v1330, %v1318
    %v1535 = vpack.c.b16 %v1331, %v1319
    %v1536 = vpack.c.b16 %v1332, %v1320
    %v1537 = vpack.c.b16 %v1333, %v1321
    %v1538 = vpack.c.b16 %v1334, %v1322
    %v1539 = vpack.c.b16 %v1347, %v1335
    %v1540 = vpack.c.b16 %v1348, %v1336
    %v1541 = vpack.c.b16 %v1349, %v1337
    %v1542 = vpack.c.b16 %v1350, %v1338
    %v1543 = vpack.c.b16 %v1351, %v1339
    %v1544 = vpack.c.b16 %v1352, %v1340
    %v1545 = vpack.c.b16 %v1353, %v1341
    %v1546 = vpack.c.b16 %v1354, %v1342
    %v1547 = vpack.c.b16 %v1355, %v1343
    %v1548 = vpack.c.b16 %v1356, %v1344
    %v1549 = vpack.c.b16 %v1357, %v1345
    %v1550 = vpack.c.b16 %v1358, %v1346
    %1743 = vmatprep.subr.bf16.mxu0 %v1360
    %1744 = vmatpush1.bf16.xpose.msra.mxu0 %v1359
    %1745 = vmatprep.subr.bf16.mxu0 %v1372
    %1746 = vmatpush1.bf16.xpose.msra.mxu0 %v1371
    %1747 = vmatprep.subr.bf16.mxu0 %v1384
    %1748 = vmatpush1.bf16.xpose.msra.mxu0 %v1383
    %1749 = vmatprep.subr.bf16.mxu0 %v1396
    %1750 = vmatpush1.bf16.xpose.msra.mxu0 %v1395
    %1751 = vmatprep.subr.bf16.mxu0 %v1408
    %1752 = vmatpush1.bf16.xpose.msra.mxu0 %v1407
    %1753 = vmatprep.subr.bf16.mxu0 %v1420
    %1754 = vmatpush1.bf16.xpose.msra.mxu0 %v1419
    %1755 = vmatprep.subr.bf16.mxu0 %v1432
    %1756 = vmatpush1.bf16.xpose.msra.mxu0 %v1431
    %1757 = vmatprep.subr.bf16.mxu0 %v1444
    %1758 = vmatpush1.bf16.xpose.msra.mxu0 %v1443
    %1759 = vmatprep.subr.bf16.mxu0 %v1456
    %1760 = vmatpush1.bf16.xpose.msra.mxu0 %v1455
    %1761 = vmatprep.subr.bf16.mxu0 %v1468
    %1762 = vmatpush1.bf16.xpose.msra.mxu0 %v1467
    %1763 = vmatprep.subr.bf16.mxu0 %v1480
    %1764 = vmatpush1.bf16.xpose.msra.mxu0 %v1479
    %1765 = vmatprep.subr.bf16.mxu0 %v1492
    %1766 = vmatpush1.bf16.xpose.msra.mxu0 %v1491
    %1767 = vmatprep.subr.bf16.mxu0 %v1504
    %1768 = vmatpush1.bf16.xpose.msra.mxu0 %v1503
    %1769 = vmatprep.subr.bf16.mxu0 %v1516
    %1770 = vmatpush1.bf16.xpose.msra.mxu0 %v1515
    %1771 = vmatprep.subr.bf16.mxu0 %v1528
    %1772 = vmatpush1.bf16.xpose.msra.mxu0 %v1527
    %1773 = vmatprep.subr.bf16.mxu0 %v1540
    %1774 = vmatpush1.bf16.xpose.msra.mxu0 %v1539
    %1775 = vmatprep.mubr.bf16.mxu0 %v568
    %1776 = vmatmul.mubr.bf16.gmra.mrb[0].mxu0 %v567
    %v1777 = vpop.f32.mrb[0].mxu0
    %v1778 = vadd.f32 %v776, %v1777
    %v1779 = vpop.f32.mrb[0].mxu0
    %v1780 = vadd.f32 %v780, %v1779
    %v1781 = vpop.f32.mrb[0].mxu0
    %v1782 = vpop.f32.mrb[0].mxu0
    %1783 = vdwg.mxu0
    %1784 = vmatprep.subr.bf16.mxu0 %v1362
    %1785 = vmatpush1.bf16.xpose.msra.mxu0 %v1361
    %1786 = vmatprep.subr.bf16.mxu0 %v1374
    %1787 = vmatpush1.bf16.xpose.msra.mxu0 %v1373
    %1788 = vmatprep.subr.bf16.mxu0 %v1386
    %1789 = vmatpush1.bf16.xpose.msra.mxu0 %v1385
    %1790 = vmatprep.subr.bf16.mxu0 %v1398
    %1791 = vmatpush1.bf16.xpose.msra.mxu0 %v1397
    %1792 = vmatprep.subr.bf16.mxu0 %v1410
    %1793 = vmatpush1.bf16.xpose.msra.mxu0 %v1409
    %1794 = vmatprep.subr.bf16.mxu0 %v1422
    %1795 = vmatpush1.bf16.xpose.msra.mxu0 %v1421
    %1796 = vmatprep.subr.bf16.mxu0 %v1434
    %1797 = vmatpush1.bf16.xpose.msra.mxu0 %v1433
    %1798 = vmatprep.subr.bf16.mxu0 %v1446
    %1799 = vmatpush1.bf16.xpose.msra.mxu0 %v1445
    %1800 = vmatprep.subr.bf16.mxu0 %v1458
    %1801 = vmatpush1.bf16.xpose.msra.mxu0 %v1457
    %1802 = vmatprep.subr.bf16.mxu0 %v1470
    %1803 = vmatpush1.bf16.xpose.msra.mxu0 %v1469
    %1804 = vmatprep.subr.bf16.mxu0 %v1482
    %1805 = vmatpush1.bf16.xpose.msra.mxu0 %v1481
    %1806 = vmatprep.subr.bf16.mxu0 %v1494
    %1807 = vmatpush1.bf16.xpose.msra.mxu0 %v1493
    %1808 = vmatprep.subr.bf16.mxu0 %v1506
    %1809 = vmatpush1.bf16.xpose.msra.mxu0 %v1505
    %1810 = vmatprep.subr.bf16.mxu0 %v1518
    %1811 = vmatpush1.bf16.xpose.msra.mxu0 %v1517
    %1812 = vmatprep.subr.bf16.mxu0 %v1530
    %1813 = vmatpush1.bf16.xpose.msra.mxu0 %v1529
    %1814 = vmatprep.subr.bf16.mxu0 %v1542
    %1815 = vmatpush1.bf16.xpose.msra.mxu0 %v1541
    %1816 = vmatprep.mubr.bf16.mxu0 %v570
    %1817 = vmatmul.mubr.bf16.gmra.mrb[0].mxu0 %v569
    %v1818 = vpop.f32.mrb[0].mxu0
    %v1819 = vadd.f32 %v1778, %v1818
    %v1820 = vpop.f32.mrb[0].mxu0
    %v1821 = vadd.f32 %v1780, %v1820
    %v1822 = vpop.f32.mrb[0].mxu0
    %v1823 = vpop.f32.mrb[0].mxu0
    %1824 = vdwg.mxu0
    %1825 = vmatprep.subr.bf16.mxu0 %v1364
    %1826 = vmatpush1.bf16.xpose.msra.mxu0 %v1363
    %1827 = vmatprep.subr.bf16.mxu0 %v1376
    %1828 = vmatpush1.bf16.xpose.msra.mxu0 %v1375
    %1829 = vmatprep.subr.bf16.mxu0 %v1388
    %1830 = vmatpush1.bf16.xpose.msra.mxu0 %v1387
    %1831 = vmatprep.subr.bf16.mxu0 %v1400
    %1832 = vmatpush1.bf16.xpose.msra.mxu0 %v1399
    %1833 = vmatprep.subr.bf16.mxu0 %v1412
    %1834 = vmatpush1.bf16.xpose.msra.mxu0 %v1411
    %1835 = vmatprep.subr.bf16.mxu0 %v1424
    %1836 = vmatpush1.bf16.xpose.msra.mxu0 %v1423
    %1837 = vmatprep.subr.bf16.mxu0 %v1436
    %1838 = vmatpush1.bf16.xpose.msra.mxu0 %v1435
    %1839 = vmatprep.subr.bf16.mxu0 %v1448
    %1840 = vmatpush1.bf16.xpose.msra.mxu0 %v1447
    %1841 = vmatprep.subr.bf16.mxu0 %v1460
    %1842 = vmatpush1.bf16.xpose.msra.mxu0 %v1459
    %1843 = vmatprep.subr.bf16.mxu0 %v1472
    %1844 = vmatpush1.bf16.xpose.msra.mxu0 %v1471
    %1845 = vmatprep.subr.bf16.mxu0 %v1484
    %1846 = vmatpush1.bf16.xpose.msra.mxu0 %v1483
    %1847 = vmatprep.subr.bf16.mxu0 %v1496
    %1848 = vmatpush1.bf16.xpose.msra.mxu0 %v1495
    %1849 = vmatprep.subr.bf16.mxu0 %v1508
    %1850 = vmatpush1.bf16.xpose.msra.mxu0 %v1507
    %1851 = vmatprep.subr.bf16.mxu0 %v1520
    %1852 = vmatpush1.bf16.xpose.msra.mxu0 %v1519
    %1853 = vmatprep.subr.bf16.mxu0 %v1532
    %1854 = vmatpush1.bf16.xpose.msra.mxu0 %v1531
    %1855 = vmatprep.subr.bf16.mxu0 %v1544
    %1856 = vmatpush1.bf16.xpose.msra.mxu0 %v1543
    %1857 = vmatprep.mubr.bf16.mxu0 %v572
    %1858 = vmatmul.mubr.bf16.gmra.mrb[0].mxu0 %v571
    %v1859 = vpop.f32.mrb[0].mxu0
    %v1860 = vadd.f32 %v1819, %v1859
    %v1861 = vpop.f32.mrb[0].mxu0
    %v1862 = vadd.f32 %v1821, %v1861
    %v1863 = vpop.f32.mrb[0].mxu0
    %v1864 = vpop.f32.mrb[0].mxu0
    %1865 = vdwg.mxu0
    %1866 = vmatprep.subr.bf16.mxu0 %v1366
    %1867 = vmatpush1.bf16.xpose.msra.mxu0 %v1365
    %1868 = vmatprep.subr.bf16.mxu0 %v1378
    %1869 = vmatpush1.bf16.xpose.msra.mxu0 %v1377
    %1870 = vmatprep.subr.bf16.mxu0 %v1390
    %1871 = vmatpush1.bf16.xpose.msra.mxu0 %v1389
    %1872 = vmatprep.subr.bf16.mxu0 %v1402
    %1873 = vmatpush1.bf16.xpose.msra.mxu0 %v1401
    %1874 = vmatprep.subr.bf16.mxu0 %v1414
    %1875 = vmatpush1.bf16.xpose.msra.mxu0 %v1413
    %1876 = vmatprep.subr.bf16.mxu0 %v1426
    %1877 = vmatpush1.bf16.xpose.msra.mxu0 %v1425
    %1878 = vmatprep.subr.bf16.mxu0 %v1438
    %1879 = vmatpush1.bf16.xpose.msra.mxu0 %v1437
    %1880 = vmatprep.subr.bf16.mxu0 %v1450
    %1881 = vmatpush1.bf16.xpose.msra.mxu0 %v1449
    %1882 = vmatprep.subr.bf16.mxu0 %v1462
    %1883 = vmatpush1.bf16.xpose.msra.mxu0 %v1461
    %1884 = vmatprep.subr.bf16.mxu0 %v1474
    %1885 = vmatpush1.bf16.xpose.msra.mxu0 %v1473
    %1886 = vmatprep.subr.bf16.mxu0 %v1486
    %1887 = vmatpush1.bf16.xpose.msra.mxu0 %v1485
    %1888 = vmatprep.subr.bf16.mxu0 %v1498
    %1889 = vmatpush1.bf16.xpose.msra.mxu0 %v1497
    %1890 = vmatprep.subr.bf16.mxu0 %v1510
    %1891 = vmatpush1.bf16.xpose.msra.mxu0 %v1509
    %1892 = vmatprep.subr.bf16.mxu0 %v1522
    %1893 = vmatpush1.bf16.xpose.msra.mxu0 %v1521
    %1894 = vmatprep.subr.bf16.mxu0 %v1534
    %1895 = vmatpush1.bf16.xpose.msra.mxu0 %v1533
    %1896 = vmatprep.subr.bf16.mxu0 %v1546
    %1897 = vmatpush1.bf16.xpose.msra.mxu0 %v1545
    %1898 = vmatprep.mubr.bf16.mxu0 %v574
    %1899 = vmatmul.mubr.bf16.gmra.mrb[0].mxu0 %v573
    %v1900 = vpop.f32.mrb[0].mxu0
    %v1901 = vadd.f32 %v1860, %v1900
    %v1902 = vpop.f32.mrb[0].mxu0
    %v1903 = vadd.f32 %v1862, %v1902
    %v1904 = vpop.f32.mrb[0].mxu0
    %v1905 = vpop.f32.mrb[0].mxu0
    %1906 = vdwg.mxu0
    %1907 = vmatprep.subr.bf16.mxu0 %v1368
    %1908 = vmatpush1.bf16.xpose.msra.mxu0 %v1367
    %1909 = vmatprep.subr.bf16.mxu0 %v1380
    %1910 = vmatpush1.bf16.xpose.msra.mxu0 %v1379
    %1911 = vmatprep.subr.bf16.mxu0 %v1392
    %1912 = vmatpush1.bf16.xpose.msra.mxu0 %v1391
    %1913 = vmatprep.subr.bf16.mxu0 %v1404
    %1914 = vmatpush1.bf16.xpose.msra.mxu0 %v1403
    %1915 = vmatprep.subr.bf16.mxu0 %v1416
    %1916 = vmatpush1.bf16.xpose.msra.mxu0 %v1415
    %1917 = vmatprep.subr.bf16.mxu0 %v1428
    %1918 = vmatpush1.bf16.xpose.msra.mxu0 %v1427
    %1919 = vmatprep.subr.bf16.mxu0 %v1440
    %1920 = vmatpush1.bf16.xpose.msra.mxu0 %v1439
    %1921 = vmatprep.subr.bf16.mxu0 %v1452
    %1922 = vmatpush1.bf16.xpose.msra.mxu0 %v1451
    %1923 = vmatprep.subr.bf16.mxu0 %v1464
    %1924 = vmatpush1.bf16.xpose.msra.mxu0 %v1463
    %1925 = vmatprep.subr.bf16.mxu0 %v1476
    %1926 = vmatpush1.bf16.xpose.msra.mxu0 %v1475
    %1927 = vmatprep.subr.bf16.mxu0 %v1488
    %1928 = vmatpush1.bf16.xpose.msra.mxu0 %v1487
    %1929 = vmatprep.subr.bf16.mxu0 %v1500
    %1930 = vmatpush1.bf16.xpose.msra.mxu0 %v1499
    %1931 = vmatprep.subr.bf16.mxu0 %v1512
    %1932 = vmatpush1.bf16.xpose.msra.mxu0 %v1511
    %1933 = vmatprep.subr.bf16.mxu0 %v1524
    %1934 = vmatpush1.bf16.xpose.msra.mxu0 %v1523
    %1935 = vmatprep.subr.bf16.mxu0 %v1536
    %1936 = vmatpush1.bf16.xpose.msra.mxu0 %v1535
    %1937 = vmatprep.subr.bf16.mxu0 %v1548
    %1938 = vmatpush1.bf16.xpose.msra.mxu0 %v1547
    %1939 = vmatprep.mubr.bf16.mxu0 %v576
    %1940 = vmatmul.mubr.bf16.gmra.mrb[0].mxu0 %v575
    %v1941 = vpop.f32.mrb[0].mxu0
    %v1942 = vadd.f32 %v1901, %v1941
    %v1943 = vpop.f32.mrb[0].mxu0
    %v1944 = vadd.f32 %v1903, %v1943
    %v1945 = vpop.f32.mrb[0].mxu0
    %v1946 = vpop.f32.mrb[0].mxu0
    %1947 = vdwg.mxu0
    %1948 = vmatprep.subr.bf16.mxu0 %v1370
    %1949 = vmatpush1.bf16.xpose.msra.mxu0 %v1369
    %1950 = vmatprep.subr.bf16.mxu0 %v1382
    %1951 = vmatpush1.bf16.xpose.msra.mxu0 %v1381
    %1952 = vmatprep.subr.bf16.mxu0 %v1394
    %1953 = vmatpush1.bf16.xpose.msra.mxu0 %v1393
    %1954 = vmatprep.subr.bf16.mxu0 %v1406
    %1955 = vmatpush1.bf16.xpose.msra.mxu0 %v1405
    %1956 = vmatprep.subr.bf16.mxu0 %v1418
    %1957 = vmatpush1.bf16.xpose.msra.mxu0 %v1417
    %1958 = vmatprep.subr.bf16.mxu0 %v1430
    %1959 = vmatpush1.bf16.xpose.msra.mxu0 %v1429
    %1960 = vmatprep.subr.bf16.mxu0 %v1442
    %1961 = vmatpush1.bf16.xpose.msra.mxu0 %v1441
    %1962 = vmatprep.subr.bf16.mxu0 %v1454
    %1963 = vmatpush1.bf16.xpose.msra.mxu0 %v1453
    %1964 = vmatprep.subr.bf16.mxu0 %v1466
    %1965 = vmatpush1.bf16.xpose.msra.mxu0 %v1465
    %1966 = vmatprep.subr.bf16.mxu0 %v1478
    %1967 = vmatpush1.bf16.xpose.msra.mxu0 %v1477
    %1968 = vmatprep.subr.bf16.mxu0 %v1490
    %1969 = vmatpush1.bf16.xpose.msra.mxu0 %v1489
    %1970 = vmatprep.subr.bf16.mxu0 %v1502
    %1971 = vmatpush1.bf16.xpose.msra.mxu0 %v1501
    %1972 = vmatprep.subr.bf16.mxu0 %v1514
    %1973 = vmatpush1.bf16.xpose.msra.mxu0 %v1513
    %1974 = vmatprep.subr.bf16.mxu0 %v1526
    %1975 = vmatpush1.bf16.xpose.msra.mxu0 %v1525
    %1976 = vmatprep.subr.bf16.mxu0 %v1538
    %1977 = vmatpush1.bf16.xpose.msra.mxu0 %v1537
    %1978 = vmatprep.subr.bf16.mxu0 %v1550
    %1979 = vmatpush1.bf16.xpose.msra.mxu0 %v1549
    %1980 = vmatprep.mubr.bf16.mxu0 %v578
    %1981 = vmatmul.mubr.bf16.gmra.mrb[0].mxu0 %v577
    %v1982 = vpop.f32.mrb[0].mxu0
    %v1983 = vadd.f32 %v1942, %v1982
    %v1984 = vpop.f32.mrb[0].mxu0
    %v1985 = vadd.f32 %v1944, %v1984
    %v1986 = vpop.f32.mrb[0].mxu0
    %v1987 = vpop.f32.mrb[0].mxu0
    %1988 = vdwg.mxu0
    %v1989 = vmax.f32 %v1983, 0.0
    %v1990 = vmax.f32 %v1985, 0.0
    %v1991 = vpack.c.bf16 %v1989, %v1989
    %v1992 = vpack.c.bf16 %v1990, %v1990
    %v1993 = vld [vmem:[%s8] sm:$0xff]
    %v1994 = vld [vmem:[%s8 + $0x8] sm:$0xff]
    %v1995 = vld [vmem:[%s8 + $0x10] sm:$0xff]
    %v1996 = vld [vmem:[%s8 + $0x18] sm:$0xff]
    %v1997 = vld [vmem:[%s8 + $0x20] sm:$0xff]
    %v1998 = vld [vmem:[%s8 + $0x28] sm:$0xff]
    %v1999 = vld [vmem:[%s8 + $0x30] sm:$0xff]
    %v2000 = vld [vmem:[%s8 + $0x38] sm:$0xff]
    %v2001 = vld [vmem:[%s8 + $0x40] sm:$0xff]
    %v2002 = vld [vmem:[%s8 + $0x48] sm:$0xff]
    %v2003 = vld [vmem:[%s8 + $0x50] sm:$0xff]
    %v2004 = vld [vmem:[%s8 + $0x58] sm:$0xff]
    %v2005 = vld [vmem:[%s8 + $0x60] sm:$0xff]
    %v2006 = vld [vmem:[%s8 + $0x68] sm:$0xff]
    %v2007 = vld [vmem:[%s8 + $0x70] sm:$0xff]
    %v2008 = vld [vmem:[%s8 + $0x78] sm:$0xff]
    %v2009 = vld [vmem:[%s9] sm:$0x1]
    %v2011 = vlaneseq
    %v2012 = vshrl.u32 %v2011, 7
    %v2013 = vsub.s32 0, %v2012
    %v2014 = vrot.slane %v2009, %v2013
    %v2032 = vunpack.c.l.b16 %v1993
    %v2033 = vunpack.c.h.b16 %v1993
    %v2034 = vunpack.c.l.b16 %v1994
    %v2035 = vunpack.c.h.b16 %v1994
    %v2036 = vunpack.c.l.b16 %v1995
    %v2037 = vunpack.c.h.b16 %v1995
    %v2038 = vunpack.c.l.b16 %v1996
    %v2039 = vunpack.c.h.b16 %v1996
    %v2040 = vunpack.c.l.b16 %v1997
    %v2041 = vunpack.c.h.b16 %v1997
    %v2042 = vunpack.c.l.b16 %v1998
    %v2043 = vunpack.c.h.b16 %v1998
    %v2044 = vunpack.c.l.b16 %v1999
    %v2045 = vunpack.c.h.b16 %v1999
    %v2046 = vunpack.c.l.b16 %v2000
    %v2047 = vunpack.c.h.b16 %v2000
    %v2048 = vunpack.c.l.b16 %v2001
    %v2049 = vunpack.c.h.b16 %v2001
    %v2050 = vunpack.c.l.b16 %v2002
    %v2051 = vunpack.c.h.b16 %v2002
    %v2052 = vunpack.c.l.b16 %v2003
    %v2053 = vunpack.c.h.b16 %v2003
    %v2054 = vunpack.c.l.b16 %v2004
    %v2055 = vunpack.c.h.b16 %v2004
    %v2056 = vunpack.c.l.b16 %v2005
    %v2057 = vunpack.c.h.b16 %v2005
    %v2058 = vunpack.c.l.b16 %v2006
    %v2059 = vunpack.c.h.b16 %v2006
    %v2060 = vunpack.c.l.b16 %v2007
    %v2061 = vunpack.c.h.b16 %v2007
    %v2062 = vunpack.c.l.b16 %v2008
    %v2063 = vunpack.c.h.b16 %v2008
    %v2064 = vpack.c.b16 %v2034, %v2032
    %v2065 = vpack.c.b16 %v2035, %v2033
    %v2066 = vpack.c.b16 %v2038, %v2036
    %v2067 = vpack.c.b16 %v2039, %v2037
    %v2068 = vpack.c.b16 %v2042, %v2040
    %v2069 = vpack.c.b16 %v2043, %v2041
    %v2070 = vpack.c.b16 %v2046, %v2044
    %v2071 = vpack.c.b16 %v2047, %v2045
    %v2072 = vpack.c.b16 %v2050, %v2048
    %v2073 = vpack.c.b16 %v2051, %v2049
    %v2074 = vpack.c.b16 %v2054, %v2052
    %v2075 = vpack.c.b16 %v2055, %v2053
    %v2076 = vpack.c.b16 %v2058, %v2056
    %v2077 = vpack.c.b16 %v2059, %v2057
    %v2078 = vpack.c.b16 %v2062, %v2060
    %v2079 = vpack.c.b16 %v2063, %v2061
    %2096 = vmatprep.subr.bf16.mxu0 %v2065
    %2097 = vmatpush1.bf16.xpose.msra.mxu0 %v2064
    %2098 = vmatprep.subr.bf16.mxu0 %v2067
    %2099 = vmatpush1.bf16.xpose.msra.mxu0 %v2066
    %2100 = vmatprep.subr.bf16.mxu0 %v2069
    %2101 = vmatpush1.bf16.xpose.msra.mxu0 %v2068
    %2102 = vmatprep.subr.bf16.mxu0 %v2071
    %2103 = vmatpush1.bf16.xpose.msra.mxu0 %v2070
    %2104 = vmatprep.subr.bf16.mxu0 %v2073
    %2105 = vmatpush1.bf16.xpose.msra.mxu0 %v2072
    %2106 = vmatprep.subr.bf16.mxu0 %v2075
    %2107 = vmatpush1.bf16.xpose.msra.mxu0 %v2074
    %2108 = vmatprep.subr.bf16.mxu0 %v2077
    %2109 = vmatpush1.bf16.xpose.msra.mxu0 %v2076
    %2110 = vmatprep.subr.bf16.mxu0 %v2079
    %2111 = vmatpush1.bf16.xpose.msra.mxu0 %v2078
    %2112 = vmatprep.subr.bf16.mxu0 0
    %2113 = vmatpush1.bf16.xpose.msra.mxu0 0
    %2114 = vmatprep.subr.bf16.mxu0 0
    %2115 = vmatpush1.bf16.xpose.msra.mxu0 0
    %2116 = vmatprep.subr.bf16.mxu0 0
    %2117 = vmatpush1.bf16.xpose.msra.mxu0 0
    %2118 = vmatprep.subr.bf16.mxu0 0
    %2119 = vmatpush1.bf16.xpose.msra.mxu0 0
    %2120 = vmatprep.subr.bf16.mxu0 0
    %2121 = vmatpush1.bf16.xpose.msra.mxu0 0
    %2122 = vmatprep.subr.bf16.mxu0 0
    %2123 = vmatpush1.bf16.xpose.msra.mxu0 0
    %2124 = vmatprep.subr.bf16.mxu0 0
    %2125 = vmatpush1.bf16.xpose.msra.mxu0 0
    %2126 = vmatprep.subr.bf16.mxu0 0
    %2127 = vmatpush1.bf16.xpose.msra.mxu0 0
    %2128 = vmatprep.mubr.bf16.mxu0 %v1992
    %2129 = vmatmul.mubr.bf16.gmra.mrb[0].mxu0 %v1991
    %v2130 = vpop.f32.mrb[0].mxu0
    %v2131 = vadd.f32 %v2014, %v2130
    %v2132 = vpop.f32.mrb[0].mxu0
    %v2133 = vpop.f32.mrb[0].mxu0
    %v2134 = vpop.f32.mrb[0].mxu0
    %2135 = vdwg.mxu0
    %2136 = vst [vmem:[#allocation2] sm:$0x3] %v2131
    // Predicated region
    $region42: #{dcnn_forward.1} parent=1 // pred_check
      _
    $region43: #{dcnn_forward.1} parent=1 // pred_check_branch
      %2138 = sbr.rel (0) target = $region45
    $region44: #{dcnn_forward.1} parent=1 // pred_region
      %s2140 = ssub.s32 32, 32
      %2141 = vsyncadd [#allocation3], %s2140
      %s2143 = sshll.u32 [#allocation2], 4
      %s2144 = int_to_ptr.vmem [resolvable:$true] %s2143
      %2146 = dma.vmem_to_hbm [thread:$0]  %s2144, 32, %s10, [#allocation3]
    $region45: #{dcnn_forward.1} parent=1 // pred_fallthru
      _
    // Predicated region
    $region46: #{dcnn_forward.1} parent=1 // pred_check
      _
    $region47: #{dcnn_forward.1} parent=1 // pred_check_branch
      %2148 = sbr.rel (0) target = $region49
    $region48: #{dcnn_forward.1} parent=1 // pred_region
      %2149 = dma.done [#allocation3], 32
    $region49: #{dcnn_forward.1} parent=1 // pred_fallthru
      _
    %2150 = vsyncpa [#allocation3], 1

</llo_original>
